<compile_context>
chip_gen: v6e
topology: v6e:2x2x1
jax: 0.10.0
libtpu: 0.0.40
codegen_flags: <defaults>
</compile_context>

<pallas_src>
import functools

import jax
import jax.numpy as jnp
from jax import lax
from jax.experimental import pallas as pl
from jax.experimental.pallas import tpu as pltpu


# ----------------------------------------------------------------------------
# Fused forward kernel: one grid step == one sample, straight-line code.
# ----------------------------------------------------------------------------
def _nlospose_kernel(col_ref, band_ref, comb_ref, scal_ref, out_ref, *,
                     n_ae, num_joints, t_size, h_size, w_size):
    T, H, W = t_size, h_size, w_size
    HW = H * W

    # offsets into the packed 1-D scalar vector (must match _pack_scalars)
    OFF_WAE1 = 0
    OFF_BAE1 = OFF_WAE1 + n_ae
    OFF_WAE2 = OFF_BAE1 + n_ae
    OFF_BAE2 = OFF_WAE2 + n_ae
    OFF_WPOSE = OFF_BAE2 + 1
    OFF_BPOSE = OFF_WPOSE + num_joints

    # ---- FeatureExtraction: 3x3x3 conv (+bias folded via ones row) + ReLU --
    # TODO(synk): real FeatureExtraction is a stack of residual 3-D convs;
    # approximated here by a single 3x3x3 conv + ReLU.
    col = col_ref[0]                                           # (K, H*W) bf16
    conv = jnp.dot(band_ref[...], col,
                   preferred_element_type=jnp.float32)         # (bd*T, H*W)
    feat = jnp.maximum(conv, 0.0)

    # ---- channel mean + FeaturePropagation, fused into one matmul ----------
    # TODO(synk): real FeaturePropagation is an FFT-based phasor-field / LCT
    # transform; approximated by a dense (T, T) temporal resampling.
    vol = jnp.dot(comb_ref[...], feat.astype(jnp.bfloat16),
                  preferred_element_type=jnp.float32)          # (T, H*W) f32

    # ---- normalize_feature: per-sample min-max ------------------------------
    mn = jnp.min(vol)
    mx = jnp.max(vol)
    f = (vol - mn) * (1.0 / (mx - mn + 1e-8))

    # ---- autoencoder (UNet3d approx): pointwise encode/decode, then fuse ----
    # TODO(synk): UNet3d down/up-sampling + skips approximated by a pointwise
    # encode(1->n_ae, ReLU) / decode(n_ae->1).
    refine = jnp.zeros_like(f) + scal_ref[OFF_BAE2]
    for c in range(n_ae):
        hid = jnp.maximum(
            f * scal_ref[OFF_WAE1 + c] + scal_ref[OFF_BAE1 + c], 0.0)
        refine = refine + hid * scal_ref[OFF_WAE2 + c]
    fused = f + refine

    # ---- pose head + 3-D soft-argmax (heatmap computed once per joint) ------
    # TODO(synk): pose backbone (3-D ResNet-50) approximated by a pointwise
    # conv to per-joint heatmaps; soft-argmax returns raw voxel indices
    # (x = W index, y = H index, z = T index), not metric coordinates
    # (WALL_SIZE / BIN_LEN scaling is not applied).
    hw_f = lax.broadcasted_iota(jnp.int32, (T, HW), 1).astype(jnp.float32)
    h_map = jnp.floor(hw_f * (1.0 / W))            # float div: no int div op
    w_map = hw_f - h_map * W
    t_map = lax.broadcasted_iota(jnp.int32, (T, HW), 0).astype(jnp.float32)

    # assemble a lane-dense (J, 128) output slab; cols 0/1/2 = (x, y, z)
    ji = lax.broadcasted_iota(jnp.int32, (num_joints, 128), 0)
    ki = lax.broadcasted_iota(jnp.int32, (num_joints, 128), 1)
    res = jnp.zeros((num_joints, 128), jnp.float32)
    for j in range(num_joints):
        heat = fused * scal_ref[OFF_WPOSE + j] + scal_ref[OFF_BPOSE + j]
        e = jnp.exp(heat - jnp.max(heat))
        inv = 1.0 / jnp.sum(e)
        vals = (jnp.sum(e * w_map) * inv,          # x = expected W index
                jnp.sum(e * h_map) * inv,          # y = expected H index
                jnp.sum(e * t_map) * inv)          # z = expected T index
        for k in range(3):
            res = jnp.where((ji == j) & (ki == k), vals[k], res)
    out_ref[0] = res


# ----------------------------------------------------------------------------
# Wrapper-side helpers (tiny, one-time per call)
# ----------------------------------------------------------------------------
def _build_im2col(meas):
    """Transposed, bias-augmented im2col: (B, Cin*9*(T+2)+1, H*W), with H*W on
    the lane axis so every kernel intermediate is lane-dense."""
    B, Cin, T, H, W = meas.shape
    xpad = jnp.pad(meas, ((0, 0), (0, 0), (1, 1), (1, 1), (1, 1)))
    slabs = []
    for ci in range(Cin):
        for kh in range(3):
            for kw in range(3):
                s = xpad[:, ci, :, kh:kh + H, kw:kw + W]   # (B, T+2, H, W)
                slabs.append(s.reshape(B, T + 2, H * W))
    ones = jnp.ones((B, 1, H * W), meas.dtype)             # bias row
    return jnp.concatenate(slabs + [ones], axis=1)


def _build_band(w_fe, b_fe, cin, basedim, t_size):
    """Fold the 3-tap temporal part of the 3x3x3 conv weights (and the bias)
    into one (basedim*T, Cin*9*(T+2)+1) matrix for a single MXU contraction.
    w_fe layout: (basedim, cin, kd, kh, kw) — PyTorch Conv3d NCDHW weights.
    TODO(synk): verify ordering against a real checkpoint before loading one."""
    T = t_size
    eyes = [jnp.eye(T, T + 2, k=kd, dtype=jnp.float32) for kd in range(3)]
    cols = []
    for ci in range(cin):
        for kh in range(3):
            for kw in range(3):
                blk = sum(w_fe[:, ci, kd, kh, kw][:, None, None]
                          * eyes[kd][None] for kd in range(3))
                cols.append(blk.reshape(basedim * T, T + 2))
    bias_col = jnp.repeat(b_fe, T)[:, None]                # (basedim*T, 1)
    return jnp.concatenate(cols + [bias_col], axis=1)


def _pack_scalars(params):
    """Pack all pointwise weights/biases into one 1-D SMEM vector."""
    return jnp.concatenate([
        params["w_ae1"].reshape(-1),
        params["b_ae1"].reshape(-1),
        params["w_ae2"].reshape(-1),
        params["b_ae2"].reshape(-1),
        params["w_pose"].reshape(-1),
        params["b_pose"].reshape(-1),
    ]).astype(jnp.float32)


# ----------------------------------------------------------------------------
# Parameters (deterministic, synthetic — NOT loaded from a checkpoint)
# ----------------------------------------------------------------------------
def init_params(key, cfg):
    basedim, cin = cfg["BASEDIM"], cfg["IN_CHANNELS"]
    J, T = cfg["NUM_JOINTS"], cfg["TIME_SIZE"]
    ks = jax.random.split(key, 4)
    p = {}
    # FeatureExtraction: one 3x3x3 conv, PyTorch [out, in, kd, kh, kw] layout
    p["w_fe"] = 0.1 * jax.random.normal(ks[0], (basedim, cin, 3, 3, 3),
                                        jnp.float32)
    p["b_fe"] = jnp.zeros((basedim,), jnp.float32)
    # FeaturePropagation: LCT-style temporal resampling matrix (fixed)
    t = jnp.arange(T, dtype=jnp.float32)
    centers = jnp.sqrt(t * T)
    P = jnp.exp(-0.5 * ((t[None, :] - centers[:, None]) / 1.5) ** 2)
    p["prop"] = (P / (jnp.sum(P, axis=1, keepdims=True) + 1e-8)).T  # (Tin,Tout)
    # Autoencoder UNet3d(in_channels=1, n_channels=4): pointwise encode/decode
    p["w_ae1"] = 0.1 * jax.random.normal(ks[1], (4,), jnp.float32)
    p["b_ae1"] = jnp.zeros((4,), jnp.float32)
    p["w_ae2"] = 0.1 * jax.random.normal(ks[2], (4,), jnp.float32)
    p["b_ae2"] = jnp.zeros((1,), jnp.float32)
    # pose_net: pointwise conv to per-joint 3-D heatmaps
    p["w_pose"] = 0.1 * jax.random.normal(ks[3], (J,), jnp.float32)
    p["b_pose"] = jnp.zeros((J,), jnp.float32)
    return p


# ----------------------------------------------------------------------------
# Forward pass (mirrors NlosPose.forward)
# ----------------------------------------------------------------------------
def nlos_pose_forward(meas, params, cfg):
    B, Cin, T, H, W = meas.shape
    basedim, J = cfg["BASEDIM"], cfg["NUM_JOINTS"]
    n_ae = params["w_ae1"].shape[0]
    HW = H * W
    K = Cin * 9 * (T + 2) + 1
    # TODO(synk): time window [time_begin, time_end) == [0, TIME_SIZE) (full
    # range as configured in the module); a sub-window would slice T here.

    col = _build_im2col(meas).astype(jnp.bfloat16)                  # (B,K,HW)
    band = _build_band(params["w_fe"], params["b_fe"], Cin, basedim, T
                       ).astype(jnp.bfloat16)                       # (bd*T,K)
    comb = (jnp.tile(params["prop"].T, (1, basedim)) / basedim
            ).astype(jnp.bfloat16)                                  # (T,bd*T)
    scal = _pack_scalars(params)                                    # 1-D SMEM

    kernel = functools.partial(
        _nlospose_kernel, n_ae=n_ae, num_joints=J,
        t_size=T, h_size=H, w_size=W)

    out = pl.pallas_call(
        kernel,
        out_shape=jax.ShapeDtypeStruct((B, J, 128), jnp.float32),
        grid=(B,),
        in_specs=[
            pl.BlockSpec((1, K, HW), lambda b: (b, 0, 0)),
            pl.BlockSpec((basedim * T, K), lambda b: (0, 0)),
            pl.BlockSpec((T, basedim * T), lambda b: (0, 0)),
            pl.BlockSpec(memory_space=pltpu.MemorySpace.SMEM),
        ],
        out_specs=pl.BlockSpec((1, J, 128), lambda b: (b, 0, 0)),
        compiler_params=pltpu.CompilerParams(
            dimension_semantics=("parallel",),
            vmem_limit_bytes=32 * 1024 * 1024),
    )(col, band, comb, scal)

    return out[:, :, :3]                       # output.view(B, -1, 3)


# ----------------------------------------------------------------------------
if __name__ == "__main__":
    cfg = dict(TIME_SIZE=16, IMAGE_SIZE=16, BASEDIM=4, IN_CHANNELS=1,
               DNUM=1, NUM_JOINTS=4, WALL_SIZE=2.0, BIN_LEN=0.01)
    key = jax.random.PRNGKey(0)
    kp, kx = jax.random.split(key)
    params = init_params(kp, cfg)

    B = 2
    meas = jax.random.uniform(
        kx, (B, cfg["IN_CHANNELS"], cfg["TIME_SIZE"],
             cfg["IMAGE_SIZE"], cfg["IMAGE_SIZE"]), dtype=jnp.float32)

    out = jax.jit(lambda m: nlos_pose_forward(m, params, cfg))(meas)
    out = jax.block_until_ready(out)
    assert out.shape == (B, cfg["NUM_JOINTS"], 3)
    assert bool(jnp.all(jnp.isfinite(out)))
    print("KERNEL_OK")
</pallas_src>

<mosaic_0001>
module attributes {stable_mosaic.version = 11 : i64} {
  func.func @_nlospose_kernel(%arg0: i32, %arg1: memref<1x163x256xbf16, #tpu.memory_space<vmem>>, %arg2: memref<64x163xbf16, #tpu.memory_space<vmem>>, %arg3: memref<16x64xbf16, #tpu.memory_space<vmem>>, %arg4: memref<21xf32, #tpu.memory_space<smem>>, %arg5: memref<1x4x128xf32, #tpu.memory_space<vmem>>) attributes {dimension_semantics = [#tpu.dimension_semantics<parallel>], iteration_bounds = array<i64: 2>, scalar_prefetch = 0 : i64, scratch_operands = 0 : i64, tpu.core_type = #tpu.core_type<tc>, window_params = [{transform_indices = @transform_0, window_bounds = array<i64: 1, 163, 256>}, {pipeline_mode = #tpu.pipeline_mode<synchronous>, transform_indices = @transform_1, window_bounds = array<i64: 64, 163>}, {pipeline_mode = #tpu.pipeline_mode<synchronous>, transform_indices = @transform_2, window_bounds = array<i64: 16, 64>}, {transform_indices = @transform_3, window_bounds = array<i64: 21>}, {transform_indices = @transform_4, window_bounds = array<i64: 1, 4, 128>}]} {
    %c0 = arith.constant 0 : index
    %c0_0 = arith.constant 0 : index
    %c0_1 = arith.constant 0 : index
    %0 = vector.load %arg1[%c0, %c0_0, %c0_1] : memref<1x163x256xbf16, #tpu.memory_space<vmem>>, vector<1x163x256xbf16>
    %1 = vector.shape_cast %0 : vector<1x163x256xbf16> to vector<163x256xbf16>
    %c0_2 = arith.constant 0 : index
    %c0_3 = arith.constant 0 : index
    %2 = vector.load %arg2[%c0_2, %c0_3] : memref<64x163xbf16, #tpu.memory_space<vmem>>, vector<64x163xbf16>
    %cst = arith.constant dense<0.000000e+00> : vector<64x256xf32>
    %3 = tpu.matmul %2, %1, %cst {dimension_numbers = #tpu.dot_dimension_numbers<[1], [0], [0], [1], [0, 0, 1, 1], [], []>} : vector<64x163xbf16>, vector<163x256xbf16>, vector<64x256xf32> -> vector<64x256xf32>
    %cst_4 = arith.constant 0.000000e+00 : f32
    %4 = vector.broadcast %cst_4 : f32 to vector<64x256xf32>
    %5 = arith.maximumf %3, %4 : vector<64x256xf32>
    %c0_5 = arith.constant 0 : index
    %c0_6 = arith.constant 0 : index
    %6 = vector.load %arg3[%c0_5, %c0_6] : memref<16x64xbf16, #tpu.memory_space<vmem>>, vector<16x64xbf16>
    %7 = arith.truncf %5 : vector<64x256xf32> to vector<64x256xbf16>
    %cst_7 = arith.constant dense<0.000000e+00> : vector<16x256xf32>
    %8 = tpu.matmul %6, %7, %cst_7 {dimension_numbers = #tpu.dot_dimension_numbers<[1], [0], [0], [1], [0, 0, 1, 1], [], []>} : vector<16x64xbf16>, vector<64x256xbf16>, vector<16x256xf32> -> vector<16x256xf32>
    %9 = vector.shape_cast %8 : vector<16x256xf32> to vector<1x16x256xf32>
    %cst_8 = arith.constant dense<0x7F800000> : vector<1xf32>
    %10 = vector.multi_reduction <minimumf>, %9, %cst_8 [1, 2] : vector<1x16x256xf32> to vector<1xf32>
    %11 = vector.shape_cast %10 : vector<1xf32> to vector<1x1x1xf32>
    %12 = vector.extract %11[0, 0, 0] : f32 from vector<1x1x1xf32>
    %13 = vector.shape_cast %8 : vector<16x256xf32> to vector<1x16x256xf32>
    %cst_9 = arith.constant dense<0xFF800000> : vector<1xf32>
    %14 = vector.multi_reduction <maximumf>, %13, %cst_9 [1, 2] : vector<1x16x256xf32> to vector<1xf32>
    %15 = vector.shape_cast %14 : vector<1xf32> to vector<1x1x1xf32>
    %16 = vector.extract %15[0, 0, 0] : f32 from vector<1x1x1xf32>
    %17 = vector.broadcast %12 : f32 to vector<16x256xf32>
    %18 = arith.subf %8, %17 : vector<16x256xf32>
    %19 = arith.subf %16, %12 : f32
    %cst_10 = arith.constant 9.99999993E-9 : f32
    %20 = arith.addf %19, %cst_10 : f32
    %cst_11 = arith.constant 1.000000e+00 : f32
    %21 = arith.divf %cst_11, %20 : f32
    %22 = vector.broadcast %21 : f32 to vector<16x256xf32>
    %23 = arith.mulf %18, %22 : vector<16x256xf32>
    %cst_12 = arith.constant 0.000000e+00 : f32
    %24 = vector.broadcast %cst_12 : f32 to vector<16x256xf32>
    %c12 = arith.constant 12 : index
    %25 = memref.load %arg4[%c12] : memref<21xf32, #tpu.memory_space<smem>>
    %26 = vector.broadcast %25 : f32 to vector<16x256xf32>
    %27 = arith.addf %24, %26 : vector<16x256xf32>
    %c0_13 = arith.constant 0 : index
    %28 = memref.load %arg4[%c0_13] : memref<21xf32, #tpu.memory_space<smem>>
    %29 = vector.broadcast %28 : f32 to vector<16x256xf32>
    %30 = arith.mulf %23, %29 : vector<16x256xf32>
    %c4 = arith.constant 4 : index
    %31 = memref.load %arg4[%c4] : memref<21xf32, #tpu.memory_space<smem>>
    %32 = vector.broadcast %31 : f32 to vector<16x256xf32>
    %33 = arith.addf %30, %32 : vector<16x256xf32>
    %cst_14 = arith.constant 0.000000e+00 : f32
    %34 = vector.broadcast %cst_14 : f32 to vector<16x256xf32>
    %35 = arith.maximumf %33, %34 : vector<16x256xf32>
    %c8 = arith.constant 8 : index
    %36 = memref.load %arg4[%c8] : memref<21xf32, #tpu.memory_space<smem>>
    %37 = vector.broadcast %36 : f32 to vector<16x256xf32>
    %38 = arith.mulf %35, %37 : vector<16x256xf32>
    %39 = arith.addf %27, %38 : vector<16x256xf32>
    %c1 = arith.constant 1 : index
    %40 = memref.load %arg4[%c1] : memref<21xf32, #tpu.memory_space<smem>>
    %41 = vector.broadcast %40 : f32 to vector<16x256xf32>
    %42 = arith.mulf %23, %41 : vector<16x256xf32>
    %c5 = arith.constant 5 : index
    %43 = memref.load %arg4[%c5] : memref<21xf32, #tpu.memory_space<smem>>
    %44 = vector.broadcast %43 : f32 to vector<16x256xf32>
    %45 = arith.addf %42, %44 : vector<16x256xf32>
    %cst_15 = arith.constant 0.000000e+00 : f32
    %46 = vector.broadcast %cst_15 : f32 to vector<16x256xf32>
    %47 = arith.maximumf %45, %46 : vector<16x256xf32>
    %c9 = arith.constant 9 : index
    %48 = memref.load %arg4[%c9] : memref<21xf32, #tpu.memory_space<smem>>
    %49 = vector.broadcast %48 : f32 to vector<16x256xf32>
    %50 = arith.mulf %47, %49 : vector<16x256xf32>
    %51 = arith.addf %39, %50 : vector<16x256xf32>
    %c2 = arith.constant 2 : index
    %52 = memref.load %arg4[%c2] : memref<21xf32, #tpu.memory_space<smem>>
    %53 = vector.broadcast %52 : f32 to vector<16x256xf32>
    %54 = arith.mulf %23, %53 : vector<16x256xf32>
    %c6 = arith.constant 6 : index
    %55 = memref.load %arg4[%c6] : memref<21xf32, #tpu.memory_space<smem>>
    %56 = vector.broadcast %55 : f32 to vector<16x256xf32>
    %57 = arith.addf %54, %56 : vector<16x256xf32>
    %cst_16 = arith.constant 0.000000e+00 : f32
    %58 = vector.broadcast %cst_16 : f32 to vector<16x256xf32>
    %59 = arith.maximumf %57, %58 : vector<16x256xf32>
    %c10 = arith.constant 10 : index
    %60 = memref.load %arg4[%c10] : memref<21xf32, #tpu.memory_space<smem>>
    %61 = vector.broadcast %60 : f32 to vector<16x256xf32>
    %62 = arith.mulf %59, %61 : vector<16x256xf32>
    %63 = arith.addf %51, %62 : vector<16x256xf32>
    %c3 = arith.constant 3 : index
    %64 = memref.load %arg4[%c3] : memref<21xf32, #tpu.memory_space<smem>>
    %65 = vector.broadcast %64 : f32 to vector<16x256xf32>
    %66 = arith.mulf %23, %65 : vector<16x256xf32>
    %c7 = arith.constant 7 : index
    %67 = memref.load %arg4[%c7] : memref<21xf32, #tpu.memory_space<smem>>
    %68 = vector.broadcast %67 : f32 to vector<16x256xf32>
    %69 = arith.addf %66, %68 : vector<16x256xf32>
    %cst_17 = arith.constant 0.000000e+00 : f32
    %70 = vector.broadcast %cst_17 : f32 to vector<16x256xf32>
    %71 = arith.maximumf %69, %70 : vector<16x256xf32>
    %c11 = arith.constant 11 : index
    %72 = memref.load %arg4[%c11] : memref<21xf32, #tpu.memory_space<smem>>
    %73 = vector.broadcast %72 : f32 to vector<16x256xf32>
    %74 = arith.mulf %71, %73 : vector<16x256xf32>
    %75 = arith.addf %63, %74 : vector<16x256xf32>
    %76 = arith.addf %23, %75 : vector<16x256xf32>
    %77 = tpu.iota {dimensions = array<i32: 1>} : vector<16x256xi32>
    %78 = arith.sitofp %77 : vector<16x256xi32> to vector<16x256xf32>
    %cst_18 = arith.constant 6.250000e-02 : f32
    %79 = vector.broadcast %cst_18 : f32 to vector<16x256xf32>
    %80 = arith.mulf %78, %79 : vector<16x256xf32>
    %81 = math.floor %80 : vector<16x256xf32>
    %cst_19 = arith.constant 1.600000e+01 : f32
    %82 = vector.broadcast %cst_19 : f32 to vector<16x256xf32>
    %83 = arith.mulf %81, %82 : vector<16x256xf32>
    %84 = arith.subf %78, %83 : vector<16x256xf32>
    %85 = tpu.iota {dimensions = array<i32: 0>} : vector<16x256xi32>
    %86 = arith.sitofp %85 : vector<16x256xi32> to vector<16x256xf32>
    %87 = tpu.iota {dimensions = array<i32: 0>} : vector<4x128xi32>
    %88 = tpu.iota {dimensions = array<i32: 1>} : vector<4x128xi32>
    %cst_20 = arith.constant 0.000000e+00 : f32
    %89 = vector.broadcast %cst_20 : f32 to vector<4x128xf32>
    %c13 = arith.constant 13 : index
    %90 = memref.load %arg4[%c13] : memref<21xf32, #tpu.memory_space<smem>>
    %91 = vector.broadcast %90 : f32 to vector<16x256xf32>
    %92 = arith.mulf %76, %91 : vector<16x256xf32>
    %c17 = arith.constant 17 : index
    %93 = memref.load %arg4[%c17] : memref<21xf32, #tpu.memory_space<smem>>
    %94 = vector.broadcast %93 : f32 to vector<16x256xf32>
    %95 = arith.addf %92, %94 : vector<16x256xf32>
    %96 = vector.shape_cast %95 : vector<16x256xf32> to vector<1x16x256xf32>
    %cst_21 = arith.constant dense<0xFF800000> : vector<1xf32>
    %97 = vector.multi_reduction <maximumf>, %96, %cst_21 [1, 2] : vector<1x16x256xf32> to vector<1xf32>
    %98 = vector.shape_cast %97 : vector<1xf32> to vector<1x1x1xf32>
    %99 = vector.extract %98[0, 0, 0] : f32 from vector<1x1x1xf32>
    %100 = vector.broadcast %99 : f32 to vector<16x256xf32>
    %101 = arith.subf %95, %100 : vector<16x256xf32>
    %102 = math.exp %101 : vector<16x256xf32>
    %103 = vector.shape_cast %102 : vector<16x256xf32> to vector<1x16x256xf32>
    %cst_22 = arith.constant dense<0.000000e+00> : vector<1xf32>
    %104 = vector.multi_reduction <add>, %103, %cst_22 [1, 2] : vector<1x16x256xf32> to vector<1xf32>
    %105 = vector.shape_cast %104 : vector<1xf32> to vector<1x1x1xf32>
    %106 = vector.extract %105[0, 0, 0] : f32 from vector<1x1x1xf32>
    %cst_23 = arith.constant 1.000000e+00 : f32
    %107 = arith.divf %cst_23, %106 : f32
    %108 = arith.mulf %102, %84 : vector<16x256xf32>
    %109 = vector.shape_cast %108 : vector<16x256xf32> to vector<1x16x256xf32>
    %cst_24 = arith.constant dense<0.000000e+00> : vector<1xf32>
    %110 = vector.multi_reduction <add>, %109, %cst_24 [1, 2] : vector<1x16x256xf32> to vector<1xf32>
    %111 = vector.shape_cast %110 : vector<1xf32> to vector<1x1x1xf32>
    %112 = vector.extract %111[0, 0, 0] : f32 from vector<1x1x1xf32>
    %113 = arith.mulf %112, %107 : f32
    %114 = arith.mulf %102, %81 : vector<16x256xf32>
    %115 = vector.shape_cast %114 : vector<16x256xf32> to vector<1x16x256xf32>
    %cst_25 = arith.constant dense<0.000000e+00> : vector<1xf32>
    %116 = vector.multi_reduction <add>, %115, %cst_25 [1, 2] : vector<1x16x256xf32> to vector<1xf32>
    %117 = vector.shape_cast %116 : vector<1xf32> to vector<1x1x1xf32>
    %118 = vector.extract %117[0, 0, 0] : f32 from vector<1x1x1xf32>
    %119 = arith.mulf %118, %107 : f32
    %120 = arith.mulf %102, %86 : vector<16x256xf32>
    %121 = vector.shape_cast %120 : vector<16x256xf32> to vector<1x16x256xf32>
    %cst_26 = arith.constant dense<0.000000e+00> : vector<1xf32>
    %122 = vector.multi_reduction <add>, %121, %cst_26 [1, 2] : vector<1x16x256xf32> to vector<1xf32>
    %123 = vector.shape_cast %122 : vector<1xf32> to vector<1x1x1xf32>
    %124 = vector.extract %123[0, 0, 0] : f32 from vector<1x1x1xf32>
    %125 = arith.mulf %124, %107 : f32
    %c0_i32 = arith.constant 0 : i32
    %126 = vector.broadcast %c0_i32 : i32 to vector<4x128xi32>
    %127 = arith.cmpi eq, %87, %126 : vector<4x128xi32>
    %c0_i32_27 = arith.constant 0 : i32
    %128 = vector.broadcast %c0_i32_27 : i32 to vector<4x128xi32>
    %129 = arith.cmpi eq, %88, %128 : vector<4x128xi32>
    %130 = arith.andi %127, %129 : vector<4x128xi1>
    %131 = vector.broadcast %113 : f32 to vector<4x128xf32>
    %132 = arith.select %130, %131, %89 : vector<4x128xi1>, vector<4x128xf32>
    %c0_i32_28 = arith.constant 0 : i32
    %133 = vector.broadcast %c0_i32_28 : i32 to vector<4x128xi32>
    %134 = arith.cmpi eq, %87, %133 : vector<4x128xi32>
    %c1_i32 = arith.constant 1 : i32
    %135 = vector.broadcast %c1_i32 : i32 to vector<4x128xi32>
    %136 = arith.cmpi eq, %88, %135 : vector<4x128xi32>
    %137 = arith.andi %134, %136 : vector<4x128xi1>
    %138 = vector.broadcast %119 : f32 to vector<4x128xf32>
    %139 = arith.select %137, %138, %132 : vector<4x128xi1>, vector<4x128xf32>
    %c0_i32_29 = arith.constant 0 : i32
    %140 = vector.broadcast %c0_i32_29 : i32 to vector<4x128xi32>
    %141 = arith.cmpi eq, %87, %140 : vector<4x128xi32>
    %c2_i32 = arith.constant 2 : i32
    %142 = vector.broadcast %c2_i32 : i32 to vector<4x128xi32>
    %143 = arith.cmpi eq, %88, %142 : vector<4x128xi32>
    %144 = arith.andi %141, %143 : vector<4x128xi1>
    %145 = vector.broadcast %125 : f32 to vector<4x128xf32>
    %146 = arith.select %144, %145, %139 : vector<4x128xi1>, vector<4x128xf32>
    %c14 = arith.constant 14 : index
    %147 = memref.load %arg4[%c14] : memref<21xf32, #tpu.memory_space<smem>>
    %148 = vector.broadcast %147 : f32 to vector<16x256xf32>
    %149 = arith.mulf %76, %148 : vector<16x256xf32>
    %c18 = arith.constant 18 : index
    %150 = memref.load %arg4[%c18] : memref<21xf32, #tpu.memory_space<smem>>
    %151 = vector.broadcast %150 : f32 to vector<16x256xf32>
    %152 = arith.addf %149, %151 : vector<16x256xf32>
    %153 = vector.shape_cast %152 : vector<16x256xf32> to vector<1x16x256xf32>
    %cst_30 = arith.constant dense<0xFF800000> : vector<1xf32>
    %154 = vector.multi_reduction <maximumf>, %153, %cst_30 [1, 2] : vector<1x16x256xf32> to vector<1xf32>
    %155 = vector.shape_cast %154 : vector<1xf32> to vector<1x1x1xf32>
    %156 = vector.extract %155[0, 0, 0] : f32 from vector<1x1x1xf32>
    %157 = vector.broadcast %156 : f32 to vector<16x256xf32>
    %158 = arith.subf %152, %157 : vector<16x256xf32>
    %159 = math.exp %158 : vector<16x256xf32>
    %160 = vector.shape_cast %159 : vector<16x256xf32> to vector<1x16x256xf32>
    %cst_31 = arith.constant dense<0.000000e+00> : vector<1xf32>
    %161 = vector.multi_reduction <add>, %160, %cst_31 [1, 2] : vector<1x16x256xf32> to vector<1xf32>
    %162 = vector.shape_cast %161 : vector<1xf32> to vector<1x1x1xf32>
    %163 = vector.extract %162[0, 0, 0] : f32 from vector<1x1x1xf32>
    %cst_32 = arith.constant 1.000000e+00 : f32
    %164 = arith.divf %cst_32, %163 : f32
    %165 = arith.mulf %159, %84 : vector<16x256xf32>
    %166 = vector.shape_cast %165 : vector<16x256xf32> to vector<1x16x256xf32>
    %cst_33 = arith.constant dense<0.000000e+00> : vector<1xf32>
    %167 = vector.multi_reduction <add>, %166, %cst_33 [1, 2] : vector<1x16x256xf32> to vector<1xf32>
    %168 = vector.shape_cast %167 : vector<1xf32> to vector<1x1x1xf32>
    %169 = vector.extract %168[0, 0, 0] : f32 from vector<1x1x1xf32>
    %170 = arith.mulf %169, %164 : f32
    %171 = arith.mulf %159, %81 : vector<16x256xf32>
    %172 = vector.shape_cast %171 : vector<16x256xf32> to vector<1x16x256xf32>
    %cst_34 = arith.constant dense<0.000000e+00> : vector<1xf32>
    %173 = vector.multi_reduction <add>, %172, %cst_34 [1, 2] : vector<1x16x256xf32> to vector<1xf32>
    %174 = vector.shape_cast %173 : vector<1xf32> to vector<1x1x1xf32>
    %175 = vector.extract %174[0, 0, 0] : f32 from vector<1x1x1xf32>
    %176 = arith.mulf %175, %164 : f32
    %177 = arith.mulf %159, %86 : vector<16x256xf32>
    %178 = vector.shape_cast %177 : vector<16x256xf32> to vector<1x16x256xf32>
    %cst_35 = arith.constant dense<0.000000e+00> : vector<1xf32>
    %179 = vector.multi_reduction <add>, %178, %cst_35 [1, 2] : vector<1x16x256xf32> to vector<1xf32>
    %180 = vector.shape_cast %179 : vector<1xf32> to vector<1x1x1xf32>
    %181 = vector.extract %180[0, 0, 0] : f32 from vector<1x1x1xf32>
    %182 = arith.mulf %181, %164 : f32
    %c1_i32_36 = arith.constant 1 : i32
    %183 = vector.broadcast %c1_i32_36 : i32 to vector<4x128xi32>
    %184 = arith.cmpi eq, %87, %183 : vector<4x128xi32>
    %c0_i32_37 = arith.constant 0 : i32
    %185 = vector.broadcast %c0_i32_37 : i32 to vector<4x128xi32>
    %186 = arith.cmpi eq, %88, %185 : vector<4x128xi32>
    %187 = arith.andi %184, %186 : vector<4x128xi1>
    %188 = vector.broadcast %170 : f32 to vector<4x128xf32>
    %189 = arith.select %187, %188, %146 : vector<4x128xi1>, vector<4x128xf32>
    %c1_i32_38 = arith.constant 1 : i32
    %190 = vector.broadcast %c1_i32_38 : i32 to vector<4x128xi32>
    %191 = arith.cmpi eq, %87, %190 : vector<4x128xi32>
    %c1_i32_39 = arith.constant 1 : i32
    %192 = vector.broadcast %c1_i32_39 : i32 to vector<4x128xi32>
    %193 = arith.cmpi eq, %88, %192 : vector<4x128xi32>
    %194 = arith.andi %191, %193 : vector<4x128xi1>
    %195 = vector.broadcast %176 : f32 to vector<4x128xf32>
    %196 = arith.select %194, %195, %189 : vector<4x128xi1>, vector<4x128xf32>
    %c1_i32_40 = arith.constant 1 : i32
    %197 = vector.broadcast %c1_i32_40 : i32 to vector<4x128xi32>
    %198 = arith.cmpi eq, %87, %197 : vector<4x128xi32>
    %c2_i32_41 = arith.constant 2 : i32
    %199 = vector.broadcast %c2_i32_41 : i32 to vector<4x128xi32>
    %200 = arith.cmpi eq, %88, %199 : vector<4x128xi32>
    %201 = arith.andi %198, %200 : vector<4x128xi1>
    %202 = vector.broadcast %182 : f32 to vector<4x128xf32>
    %203 = arith.select %201, %202, %196 : vector<4x128xi1>, vector<4x128xf32>
    %c15 = arith.constant 15 : index
    %204 = memref.load %arg4[%c15] : memref<21xf32, #tpu.memory_space<smem>>
    %205 = vector.broadcast %204 : f32 to vector<16x256xf32>
    %206 = arith.mulf %76, %205 : vector<16x256xf32>
    %c19 = arith.constant 19 : index
    %207 = memref.load %arg4[%c19] : memref<21xf32, #tpu.memory_space<smem>>
    %208 = vector.broadcast %207 : f32 to vector<16x256xf32>
    %209 = arith.addf %206, %208 : vector<16x256xf32>
    %210 = vector.shape_cast %209 : vector<16x256xf32> to vector<1x16x256xf32>
    %cst_42 = arith.constant dense<0xFF800000> : vector<1xf32>
    %211 = vector.multi_reduction <maximumf>, %210, %cst_42 [1, 2] : vector<1x16x256xf32> to vector<1xf32>
    %212 = vector.shape_cast %211 : vector<1xf32> to vector<1x1x1xf32>
    %213 = vector.extract %212[0, 0, 0] : f32 from vector<1x1x1xf32>
    %214 = vector.broadcast %213 : f32 to vector<16x256xf32>
    %215 = arith.subf %209, %214 : vector<16x256xf32>
    %216 = math.exp %215 : vector<16x256xf32>
    %217 = vector.shape_cast %216 : vector<16x256xf32> to vector<1x16x256xf32>
    %cst_43 = arith.constant dense<0.000000e+00> : vector<1xf32>
    %218 = vector.multi_reduction <add>, %217, %cst_43 [1, 2] : vector<1x16x256xf32> to vector<1xf32>
    %219 = vector.shape_cast %218 : vector<1xf32> to vector<1x1x1xf32>
    %220 = vector.extract %219[0, 0, 0] : f32 from vector<1x1x1xf32>
    %cst_44 = arith.constant 1.000000e+00 : f32
    %221 = arith.divf %cst_44, %220 : f32
    %222 = arith.mulf %216, %84 : vector<16x256xf32>
    %223 = vector.shape_cast %222 : vector<16x256xf32> to vector<1x16x256xf32>
    %cst_45 = arith.constant dense<0.000000e+00> : vector<1xf32>
    %224 = vector.multi_reduction <add>, %223, %cst_45 [1, 2] : vector<1x16x256xf32> to vector<1xf32>
    %225 = vector.shape_cast %224 : vector<1xf32> to vector<1x1x1xf32>
    %226 = vector.extract %225[0, 0, 0] : f32 from vector<1x1x1xf32>
    %227 = arith.mulf %226, %221 : f32
    %228 = arith.mulf %216, %81 : vector<16x256xf32>
    %229 = vector.shape_cast %228 : vector<16x256xf32> to vector<1x16x256xf32>
    %cst_46 = arith.constant dense<0.000000e+00> : vector<1xf32>
    %230 = vector.multi_reduction <add>, %229, %cst_46 [1, 2] : vector<1x16x256xf32> to vector<1xf32>
    %231 = vector.shape_cast %230 : vector<1xf32> to vector<1x1x1xf32>
    %232 = vector.extract %231[0, 0, 0] : f32 from vector<1x1x1xf32>
    %233 = arith.mulf %232, %221 : f32
    %234 = arith.mulf %216, %86 : vector<16x256xf32>
    %235 = vector.shape_cast %234 : vector<16x256xf32> to vector<1x16x256xf32>
    %cst_47 = arith.constant dense<0.000000e+00> : vector<1xf32>
    %236 = vector.multi_reduction <add>, %235, %cst_47 [1, 2] : vector<1x16x256xf32> to vector<1xf32>
    %237 = vector.shape_cast %236 : vector<1xf32> to vector<1x1x1xf32>
    %238 = vector.extract %237[0, 0, 0] : f32 from vector<1x1x1xf32>
    %239 = arith.mulf %238, %221 : f32
    %c2_i32_48 = arith.constant 2 : i32
    %240 = vector.broadcast %c2_i32_48 : i32 to vector<4x128xi32>
    %241 = arith.cmpi eq, %87, %240 : vector<4x128xi32>
    %c0_i32_49 = arith.constant 0 : i32
    %242 = vector.broadcast %c0_i32_49 : i32 to vector<4x128xi32>
    %243 = arith.cmpi eq, %88, %242 : vector<4x128xi32>
    %244 = arith.andi %241, %243 : vector<4x128xi1>
    %245 = vector.broadcast %227 : f32 to vector<4x128xf32>
    %246 = arith.select %244, %245, %203 : vector<4x128xi1>, vector<4x128xf32>
    %c2_i32_50 = arith.constant 2 : i32
    %247 = vector.broadcast %c2_i32_50 : i32 to vector<4x128xi32>
    %248 = arith.cmpi eq, %87, %247 : vector<4x128xi32>
    %c1_i32_51 = arith.constant 1 : i32
    %249 = vector.broadcast %c1_i32_51 : i32 to vector<4x128xi32>
    %250 = arith.cmpi eq, %88, %249 : vector<4x128xi32>
    %251 = arith.andi %248, %250 : vector<4x128xi1>
    %252 = vector.broadcast %233 : f32 to vector<4x128xf32>
    %253 = arith.select %251, %252, %246 : vector<4x128xi1>, vector<4x128xf32>
    %c2_i32_52 = arith.constant 2 : i32
    %254 = vector.broadcast %c2_i32_52 : i32 to vector<4x128xi32>
    %255 = arith.cmpi eq, %87, %254 : vector<4x128xi32>
    %c2_i32_53 = arith.constant 2 : i32
    %256 = vector.broadcast %c2_i32_53 : i32 to vector<4x128xi32>
    %257 = arith.cmpi eq, %88, %256 : vector<4x128xi32>
    %258 = arith.andi %255, %257 : vector<4x128xi1>
    %259 = vector.broadcast %239 : f32 to vector<4x128xf32>
    %260 = arith.select %258, %259, %253 : vector<4x128xi1>, vector<4x128xf32>
    %c16 = arith.constant 16 : index
    %261 = memref.load %arg4[%c16] : memref<21xf32, #tpu.memory_space<smem>>
    %262 = vector.broadcast %261 : f32 to vector<16x256xf32>
    %263 = arith.mulf %76, %262 : vector<16x256xf32>
    %c20 = arith.constant 20 : index
    %264 = memref.load %arg4[%c20] : memref<21xf32, #tpu.memory_space<smem>>
    %265 = vector.broadcast %264 : f32 to vector<16x256xf32>
    %266 = arith.addf %263, %265 : vector<16x256xf32>
    %267 = vector.shape_cast %266 : vector<16x256xf32> to vector<1x16x256xf32>
    %cst_54 = arith.constant dense<0xFF800000> : vector<1xf32>
    %268 = vector.multi_reduction <maximumf>, %267, %cst_54 [1, 2] : vector<1x16x256xf32> to vector<1xf32>
    %269 = vector.shape_cast %268 : vector<1xf32> to vector<1x1x1xf32>
    %270 = vector.extract %269[0, 0, 0] : f32 from vector<1x1x1xf32>
    %271 = vector.broadcast %270 : f32 to vector<16x256xf32>
    %272 = arith.subf %266, %271 : vector<16x256xf32>
    %273 = math.exp %272 : vector<16x256xf32>
    %274 = vector.shape_cast %273 : vector<16x256xf32> to vector<1x16x256xf32>
    %cst_55 = arith.constant dense<0.000000e+00> : vector<1xf32>
    %275 = vector.multi_reduction <add>, %274, %cst_55 [1, 2] : vector<1x16x256xf32> to vector<1xf32>
    %276 = vector.shape_cast %275 : vector<1xf32> to vector<1x1x1xf32>
    %277 = vector.extract %276[0, 0, 0] : f32 from vector<1x1x1xf32>
    %cst_56 = arith.constant 1.000000e+00 : f32
    %278 = arith.divf %cst_56, %277 : f32
    %279 = arith.mulf %273, %84 : vector<16x256xf32>
    %280 = vector.shape_cast %279 : vector<16x256xf32> to vector<1x16x256xf32>
    %cst_57 = arith.constant dense<0.000000e+00> : vector<1xf32>
    %281 = vector.multi_reduction <add>, %280, %cst_57 [1, 2] : vector<1x16x256xf32> to vector<1xf32>
    %282 = vector.shape_cast %281 : vector<1xf32> to vector<1x1x1xf32>
    %283 = vector.extract %282[0, 0, 0] : f32 from vector<1x1x1xf32>
    %284 = arith.mulf %283, %278 : f32
    %285 = arith.mulf %273, %81 : vector<16x256xf32>
    %286 = vector.shape_cast %285 : vector<16x256xf32> to vector<1x16x256xf32>
    %cst_58 = arith.constant dense<0.000000e+00> : vector<1xf32>
    %287 = vector.multi_reduction <add>, %286, %cst_58 [1, 2] : vector<1x16x256xf32> to vector<1xf32>
    %288 = vector.shape_cast %287 : vector<1xf32> to vector<1x1x1xf32>
    %289 = vector.extract %288[0, 0, 0] : f32 from vector<1x1x1xf32>
    %290 = arith.mulf %289, %278 : f32
    %291 = arith.mulf %273, %86 : vector<16x256xf32>
    %292 = vector.shape_cast %291 : vector<16x256xf32> to vector<1x16x256xf32>
    %cst_59 = arith.constant dense<0.000000e+00> : vector<1xf32>
    %293 = vector.multi_reduction <add>, %292, %cst_59 [1, 2] : vector<1x16x256xf32> to vector<1xf32>
    %294 = vector.shape_cast %293 : vector<1xf32> to vector<1x1x1xf32>
    %295 = vector.extract %294[0, 0, 0] : f32 from vector<1x1x1xf32>
    %296 = arith.mulf %295, %278 : f32
    %c3_i32 = arith.constant 3 : i32
    %297 = vector.broadcast %c3_i32 : i32 to vector<4x128xi32>
    %298 = arith.cmpi eq, %87, %297 : vector<4x128xi32>
    %c0_i32_60 = arith.constant 0 : i32
    %299 = vector.broadcast %c0_i32_60 : i32 to vector<4x128xi32>
    %300 = arith.cmpi eq, %88, %299 : vector<4x128xi32>
    %301 = arith.andi %298, %300 : vector<4x128xi1>
    %302 = vector.broadcast %284 : f32 to vector<4x128xf32>
    %303 = arith.select %301, %302, %260 : vector<4x128xi1>, vector<4x128xf32>
    %c3_i32_61 = arith.constant 3 : i32
    %304 = vector.broadcast %c3_i32_61 : i32 to vector<4x128xi32>
    %305 = arith.cmpi eq, %87, %304 : vector<4x128xi32>
    %c1_i32_62 = arith.constant 1 : i32
    %306 = vector.broadcast %c1_i32_62 : i32 to vector<4x128xi32>
    %307 = arith.cmpi eq, %88, %306 : vector<4x128xi32>
    %308 = arith.andi %305, %307 : vector<4x128xi1>
    %309 = vector.broadcast %290 : f32 to vector<4x128xf32>
    %310 = arith.select %308, %309, %303 : vector<4x128xi1>, vector<4x128xf32>
    %c3_i32_63 = arith.constant 3 : i32
    %311 = vector.broadcast %c3_i32_63 : i32 to vector<4x128xi32>
    %312 = arith.cmpi eq, %87, %311 : vector<4x128xi32>
    %c2_i32_64 = arith.constant 2 : i32
    %313 = vector.broadcast %c2_i32_64 : i32 to vector<4x128xi32>
    %314 = arith.cmpi eq, %88, %313 : vector<4x128xi32>
    %315 = arith.andi %312, %314 : vector<4x128xi1>
    %316 = vector.broadcast %296 : f32 to vector<4x128xf32>
    %317 = arith.select %315, %316, %310 : vector<4x128xi1>, vector<4x128xf32>
    %c0_65 = arith.constant 0 : index
    %c0_66 = arith.constant 0 : index
    %c0_67 = arith.constant 0 : index
    %318 = vector.load %arg5[%c0_65, %c0_66, %c0_67] : memref<1x4x128xf32, #tpu.memory_space<vmem>>, vector<1x4x128xf32>
    %319 = vector.shape_cast %318 : vector<1x4x128xf32> to vector<4x128xf32>
    %320 = vector.shape_cast %317 : vector<4x128xf32> to vector<1x4x128xf32>
    tpu.vector_store %arg5[%c0_65, %c0_66, %c0_67], %320 {strides = array<i32>} : memref<1x4x128xf32, #tpu.memory_space<vmem>>, vector<1x4x128xf32>,
    return
  }
  func.func @transform_0(%arg0: i32) -> (i32, i32, i32) {
    %c0_i32 = arith.constant 0 : i32
    %c0_i32_0 = arith.constant 0 : i32
    %c0_i32_1 = arith.constant 0 : i32
    return %arg0, %c0_i32, %c0_i32_0 : i32, i32, i32
  }
  func.func @transform_1(%arg0: i32) -> (i32, i32) {
    %c0_i32 = arith.constant 0 : i32
    %c0_i32_0 = arith.constant 0 : i32
    %c0_i32_1 = arith.constant 0 : i32
    return %c0_i32, %c0_i32_0 : i32, i32
  }
  func.func @transform_2(%arg0: i32) -> (i32, i32) {
    %c0_i32 = arith.constant 0 : i32
    %c0_i32_0 = arith.constant 0 : i32
    %c0_i32_1 = arith.constant 0 : i32
    return %c0_i32, %c0_i32_0 : i32, i32
  }
  func.func @transform_3(%arg0: i32) -> i32 {
    %c0_i32 = arith.constant 0 : i32
    %c0_i32_0 = arith.constant 0 : i32
    return %c0_i32 : i32
  }
  func.func @transform_4(%arg0: i32) -> (i32, i32, i32) {
    %c0_i32 = arith.constant 0 : i32
    %c0_i32_0 = arith.constant 0 : i32
    %c0_i32_1 = arith.constant 0 : i32
    return %arg0, %c0_i32, %c0_i32_0 : i32, i32, i32
  }
}

</mosaic_0001>

<llo_original>
// kernel: _lambda_.1
$region0: #{_lambda_.1}
  #allocation0 [shape = 'u32[]', space=smem, size = 0x4, offset = 0x4, fixed_abs, tag = 'smem constant byte address 0x4 - core index']
  #allocation1 [shape = 'u32[144,128]{1,0:T(1,128)}', space=vmem, size = 0x12000, scoped, tag = 'internal scratch']
  %s0 = inlined_call_operand.vmem [shape: bf16[2,163,256], index: 0, kind: input, shape index: {}]
  %s1 = inlined_call_operand.vmem [shape: bf16[64,163], index: 1, kind: input, shape index: {}]
  %s2 = inlined_call_operand.vmem [shape: bf16[16,64], index: 2, kind: input, shape index: {}]
  %s3 = inlined_call_operand.vmem [shape: f32[21], index: 3, kind: input, shape index: {}]
  %s4 = inlined_call_operand.vmem [shape: f32[2,4,128], index: 4, kind: output, shape index: {}]
  %s5 = sld [smem:[#allocation0]]
  $region53: #{_lambda_.1} parent=0
    _
  %s7 = ssub.s32 1, %s5
  %s8 = scalar_select 0, %s7, %s5
  $region1: #{_lambda_.1} parent=0
    #allocation2 [shape = 'u8[512]{0}', space=smem, size = 0x200, scoped, tag = 'input window, operand 3, single buffered']
    #allocation3 [shape = 's32[2]{0}', space=sflag, size = 0x8, scoped, tag = 'scoped memory for _lambda_.1']
    %9 = vsyncpa [#allocation3], 0
    loop: start=0, step=1, limit=4
    $region2: #{_lambda_.1} parent=1 // loop_pre_header
      _
    $region3: #{_lambda_.1} parent=1 // loop_header
      %s11 = sphi 0, %s15
      %p12 = scmp.ge.s32.totalorder %s11, 4
      %s21 = sphi 0, %s23
      %s24 = sphi 0, %s21
      %s25 = sphi 0, %s24
      %s41 = sphi 0, %s25
      %s45 = sphi 0, %s45
      %s47 = sphi 0, %s45
      %s48 = sphi 0, %s47
      %s62 = sphi 0, %s48
      %s66 = sphi 0, %s66
      %s68 = sphi 0, %s66
      %s69 = sphi 0, %s68
      %s83 = sphi 0, %s69
      %s87 = sphi 0, %s87
      %s89 = sphi 0, %s87
      %s90 = sphi 0, %s89
      %s104 = sphi 0, %s90
      %s110 = sphi 0, %s112
      %s113 = sphi 0, %s110
      %s114 = sphi 0, %s113
      %s130 = sphi 0, %s114
    $region4: #{_lambda_.1} parent=1 // loop_header_branch
      %14 = sbr.rel (%p12) target = $region8
    $region5: #{_lambda_.1} parent=1 // loop_body
      %s16 = ssub.s32 %s11, 1
      %s17 = ssub.s32 %s11, 2
      %s18 = sadd.s32 %s11, 1
      %s19 = ssub.s32 %s11, %s18
      %p20 = scmp.eq.s32.totalorder %s19, 0
      %s22 = sadd.s32 %s21, 1
      %s23 = scalar_select %p20, %s21, %s22
      %p26 = pneg %p20
      %p27 = scmp.eq.s32.totalorder %s11, 1
      %p28 = por %p26, %p27
      %p29 = scmp.ne.s32.totalorder %s21, %s24
      %p30 = scmp.eq.s32.totalorder %s11, 0
      %p31 = por %p29, %p30
      %p32 = scmp.ne.s32.totalorder %s21, %s24
      %p33 = scmp.eq.s32.totalorder %s16, 1
      %p34 = por %p32, %p33
      %p35 = scmp.ne.s32.totalorder %s24, %s25
      %p36 = scmp.eq.s32.totalorder %s16, 0
      %p37 = por %p35, %p36
      %p38 = scmp.ne.s32.totalorder %s24, %s25
      %p39 = scmp.eq.s32.totalorder %s17, 1
      %p40 = por %p38, %p39
      %p42 = scmp.ne.s32.totalorder %s25, %s41
      %p43 = scmp.eq.s32.totalorder %s17, 0
      %p44 = por %p42, %p43
      %s46 = sadd.s32 %s45, 1
      %p49 = scmp.eq.s32.totalorder %s11, 1
      %p50 = scmp.ne.s32.totalorder %s45, %s47
      %p51 = scmp.eq.s32.totalorder %s11, 0
      %p52 = por %p50, %p51
      %p53 = scmp.ne.s32.totalorder %s45, %s47
      %p54 = scmp.eq.s32.totalorder %s16, 1
      %p55 = por %p53, %p54
      %p56 = scmp.ne.s32.totalorder %s47, %s48
      %p57 = scmp.eq.s32.totalorder %s16, 0
      %p58 = por %p56, %p57
      %p59 = scmp.ne.s32.totalorder %s47, %s48
      %p60 = scmp.eq.s32.totalorder %s17, 1
      %p61 = por %p59, %p60
      %p63 = scmp.ne.s32.totalorder %s48, %s62
      %p64 = scmp.eq.s32.totalorder %s17, 0
      %p65 = por %p63, %p64
      %s67 = sadd.s32 %s66, 1
      %p70 = scmp.eq.s32.totalorder %s11, 1
      %p71 = scmp.ne.s32.totalorder %s66, %s68
      %p72 = scmp.eq.s32.totalorder %s11, 0
      %p73 = por %p71, %p72
      %p74 = scmp.ne.s32.totalorder %s66, %s68
      %p75 = scmp.eq.s32.totalorder %s16, 1
      %p76 = por %p74, %p75
      %p77 = scmp.ne.s32.totalorder %s68, %s69
      %p78 = scmp.eq.s32.totalorder %s16, 0
      %p79 = por %p77, %p78
      %p80 = scmp.ne.s32.totalorder %s68, %s69
      %p81 = scmp.eq.s32.totalorder %s17, 1
      %p82 = por %p80, %p81
      %p84 = scmp.ne.s32.totalorder %s69, %s83
      %p85 = scmp.eq.s32.totalorder %s17, 0
      %p86 = por %p84, %p85
      %s88 = sadd.s32 %s87, 1
      %p91 = scmp.eq.s32.totalorder %s11, 1
      %p92 = scmp.ne.s32.totalorder %s87, %s89
      %p93 = scmp.eq.s32.totalorder %s11, 0
      %p94 = por %p92, %p93
      %p95 = scmp.ne.s32.totalorder %s87, %s89
      %p96 = scmp.eq.s32.totalorder %s16, 1
      %p97 = por %p95, %p96
      %p98 = scmp.ne.s32.totalorder %s89, %s90
      %p99 = scmp.eq.s32.totalorder %s16, 0
      %p100 = por %p98, %p99
      %p101 = scmp.ne.s32.totalorder %s89, %s90
      %p102 = scmp.eq.s32.totalorder %s17, 1
      %p103 = por %p101, %p102
      %p105 = scmp.ne.s32.totalorder %s90, %s104
      %p106 = scmp.eq.s32.totalorder %s17, 0
      %p107 = por %p105, %p106
      %s108 = ssub.s32 %s11, %s18
      %p109 = scmp.eq.s32.totalorder %s108, 0
      %s111 = sadd.s32 %s110, 1
      %s112 = scalar_select %p109, %s110, %s111
      %p115 = pneg %p109
      %p116 = scmp.eq.s32.totalorder %s11, 1
      %p117 = por %p115, %p116
      %p118 = scmp.ne.s32.totalorder %s110, %s113
      %p119 = scmp.eq.s32.totalorder %s11, 0
      %p120 = por %p118, %p119
      %p121 = scmp.ne.s32.totalorder %s110, %s113
      %p122 = scmp.eq.s32.totalorder %s16, 1
      %p123 = por %p121, %p122
      %p124 = scmp.ne.s32.totalorder %s113, %s114
      %p125 = scmp.eq.s32.totalorder %s16, 0
      %p126 = por %p124, %p125
      %p127 = scmp.ne.s32.totalorder %s113, %s114
      %p128 = scmp.eq.s32.totalorder %s17, 1
      %p129 = por %p127, %p128
      %p131 = scmp.ne.s32.totalorder %s114, %s130
      %p132 = scmp.eq.s32.totalorder %s17, 0
      %p133 = por %p131, %p132
      %p134 = scmp.le.s32.totalorder 1, %s11
      %p135 = scmp.lt.s32.totalorder %s11, 3
      %p136 = pnand %p134, %p135
      %p137 = pneg %p136
      // Predicated region
      $region9: #{_lambda_.1} parent=5 // pred_check
        _
      $region10: #{_lambda_.1} parent=5 // pred_check_branch
        %139 = sbr.rel (%p136) target = $region12
      $region11: #{_lambda_.1} parent=5 // pred_region
        %s140 = ssub.s32 %s11, 1
        // Predicated region
        $region13: #{_lambda_.1} parent=11 // pred_check
          %p141 = pneg %p58
        $region14: #{_lambda_.1} parent=11 // pred_check_branch
          %143 = sbr.rel (%p141) target = $region16
        $region15: #{_lambda_.1} parent=11 // pred_region
          _
        $region16: #{_lambda_.1} parent=11 // pred_fallthru
          _
        // Predicated region
        $region17: #{_lambda_.1} parent=11 // pred_check
          %p144 = pneg %p79
        $region18: #{_lambda_.1} parent=11 // pred_check_branch
          %146 = sbr.rel (%p144) target = $region20
        $region19: #{_lambda_.1} parent=11 // pred_region
          _
        $region20: #{_lambda_.1} parent=11 // pred_fallthru
          _
        // Predicated region
        $region21: #{_lambda_.1} parent=11 // pred_check
          %p147 = pneg %p100
        $region22: #{_lambda_.1} parent=11 // pred_check_branch
          %149 = sbr.rel (%p147) target = $region24
        $region23: #{_lambda_.1} parent=11 // pred_region
          %s151 = ssub.s32 16, 16
          %152 = vsyncadd [#allocation3], %s151
          %s154 = sshll.u32 %s3, 4
          %s155 = int_to_ptr.vmem [resolvable:$true] %s154
          %157 = dma.vmem_to_smem %s155, 16, [#allocation2], [#allocation3]
        $region24: #{_lambda_.1} parent=11 // pred_fallthru
          _
      $region12: #{_lambda_.1} parent=5 // pred_fallthru
        _
      %p158 = scmp.lt.s32.totalorder %s11, 2
      // Predicated region
      $region25: #{_lambda_.1} parent=5 // pred_check
        %p159 = pneg %p158
      $region26: #{_lambda_.1} parent=5 // pred_check_branch
        %161 = sbr.rel (%p159) target = $region28
      $region27: #{_lambda_.1} parent=5 // pred_region
        // Predicated region
        $region29: #{_lambda_.1} parent=27 // pred_check
          %p162 = pneg %p31
        $region30: #{_lambda_.1} parent=27 // pred_check_branch
          %164 = sbr.rel (%p162) target = $region32
        $region31: #{_lambda_.1} parent=27 // pred_region
          %p165 = scmp.lt.s32.totalorder %s11, 1
          %s166 = scalar_select %p165, %s11, 1
          %s167 = smul.addr %s166, 42
          %s168 = smul.addr %s167, 4
          %s169 = scalar_lea.vmem %s0, %s168
        $region32: #{_lambda_.1} parent=27 // pred_fallthru
          _
      $region28: #{_lambda_.1} parent=5 // pred_fallthru
        _
      %p170 = scmp.le.s32.totalorder 1, %s11
      %p171 = scmp.lt.s32.totalorder %s11, 3
      %p172 = pnand %p170, %p171
      %p173 = pneg %p172
      // Predicated region
      $region33: #{_lambda_.1} parent=5 // pred_check
        _
      $region34: #{_lambda_.1} parent=5 // pred_check_branch
        %175 = sbr.rel (%p172) target = $region36
      $region35: #{_lambda_.1} parent=5 // pred_region
        %s176 = ssub.s32 %s11, 1
        // Predicated region
        $region37: #{_lambda_.1} parent=35 // pred_check
          %p177 = pneg %p100
        $region38: #{_lambda_.1} parent=35 // pred_check_branch
          %179 = sbr.rel (%p177) target = $region40
        $region39: #{_lambda_.1} parent=35 // pred_region
          %180 = dma.done [#allocation3], 16
        $region40: #{_lambda_.1} parent=35 // pred_fallthru
          _
        %181 = sfence
        %p182 = scmp.lt.s32.totalorder %s16, 1
        %s183 = scalar_select %p182, %s16, 1
        %s184 = smul.addr %s183, 42
        %s185 = smul.addr %s184, 4
        %s186 = scalar_lea.vmem %s0, %s185
        %p187 = pneg %p37
        %p188 = pneg %p34
        %p189 = pneg %p58
        %p190 = pneg %p55
        %p191 = pneg %p79
        %p192 = pneg %p76
        %p193 = pneg %p100
        %p194 = pneg %p97
        %p195 = pneg %p126
        %p196 = pneg %p123
        %p197 = scmp.lt.s32.totalorder %s16, 1
        %s198 = scalar_select %p197, %s16, 1
        %s199 = smul.addr %s198, 4
        %s200 = scalar_lea.vmem %s4, %s199
        %p201 = scmp.lt.s32.totalorder %s16, 1
        %s202 = scalar_select %p201, %s16, 1
        %s203 = smul.addr %s202, 42
        %s204 = smul.addr %s203, 4
        %s205 = scalar_lea.vmem %s0, %s204
        %p206 = scmp.lt.s32.totalorder %s16, 1
        %s207 = scalar_select %p206, %s16, 1
        %s208 = smul.addr %s207, 4
        %s209 = scalar_lea.vmem %s4, %s208
        %v211 = vld [vmem:[%s205] sm:$0xff]
        %v212 = vld [vmem:[%s205 + $0x8] sm:$0xff]
        %v213 = vld [vmem:[%s205 + $0x10] sm:$0xff]
        %v214 = vld [vmem:[%s205 + $0x18] sm:$0xff]
        %v215 = vld [vmem:[%s205 + $0x20] sm:$0xff]
        %v216 = vld [vmem:[%s205 + $0x28] sm:$0xff]
        %v217 = vld [vmem:[%s205 + $0x30] sm:$0xff]
        %v218 = vld [vmem:[%s205 + $0x38] sm:$0xff]
        %v219 = vld [vmem:[%s205 + $0x40] sm:$0xff]
        %v220 = vld [vmem:[%s205 + $0x48] sm:$0xff]
        %v221 = vld [vmem:[%s205 + $0x50] sm:$0xff]
        %v222 = vld [vmem:[%s205 + $0x58] sm:$0xff]
        %v223 = vld [vmem:[%s205 + $0x60] sm:$0xff]
        %v224 = vld [vmem:[%s205 + $0x68] sm:$0xff]
        %v225 = vld [vmem:[%s205 + $0x70] sm:$0xff]
        %v226 = vld [vmem:[%s205 + $0x78] sm:$0xff]
        %v227 = vld [vmem:[%s205 + $0x80] sm:$0xff]
        %v228 = vld [vmem:[%s205 + $0x88] sm:$0xff]
        %v229 = vld [vmem:[%s205 + $0x90] sm:$0xff]
        %v230 = vld [vmem:[%s205 + $0x98] sm:$0xff]
        %v231 = vld [vmem:[%s205 + $0xa0] sm:$0x33]
        %v232 = vld [vmem:[%s1] sm:$0xff]
        %v233 = vld [vmem:[%s1 + $0x8] sm:$0xff]
        %v234 = vld [vmem:[%s1 + $0x10] sm:$0xff]
        %v235 = vld [vmem:[%s1 + $0x18] sm:$0xff]
        %v236 = vld [vmem:[%s1 + $0x20] sm:$0xff]
        %v237 = vld [vmem:[%s1 + $0x28] sm:$0xff]
        %v238 = vld [vmem:[%s1 + $0x30] sm:$0xff]
        %v239 = vld [vmem:[%s1 + $0x38] sm:$0xff]
        %v248 = vunpack.c.l.b16 %v232
        %v249 = vunpack.c.h.b16 %v232
        %v250 = vunpack.c.l.b16 %v233
        %v251 = vunpack.c.h.b16 %v233
        %v252 = vunpack.c.l.b16 %v234
        %v253 = vunpack.c.h.b16 %v234
        %v254 = vunpack.c.l.b16 %v235
        %v255 = vunpack.c.h.b16 %v235
        %v256 = vunpack.c.l.b16 %v236
        %v257 = vunpack.c.h.b16 %v236
        %v258 = vunpack.c.l.b16 %v237
        %v259 = vunpack.c.h.b16 %v237
        %v260 = vunpack.c.l.b16 %v238
        %v261 = vunpack.c.h.b16 %v238
        %v262 = vunpack.c.l.b16 %v239
        %v263 = vunpack.c.h.b16 %v239
        %v264 = vpack.c.b16 %v250, %v248
        %v265 = vpack.c.b16 %v251, %v249
        %v266 = vpack.c.b16 %v254, %v252
        %v267 = vpack.c.b16 %v255, %v253
        %v268 = vpack.c.b16 %v258, %v256
        %v269 = vpack.c.b16 %v259, %v257
        %v270 = vpack.c.b16 %v262, %v260
        %v271 = vpack.c.b16 %v263, %v261
        %v297 = vunpack.c.l.b16 %v211
        %v298 = vunpack.c.h.b16 %v211
        %v299 = vunpack.c.l.b16 %v212
        %v300 = vunpack.c.h.b16 %v212
        %v301 = vunpack.c.l.b16 %v213
        %v302 = vunpack.c.h.b16 %v213
        %v303 = vunpack.c.l.b16 %v214
        %v304 = vunpack.c.h.b16 %v214
        %v305 = vunpack.c.l.b16 %v215
        %v306 = vunpack.c.h.b16 %v215
        %v307 = vunpack.c.l.b16 %v216
        %v308 = vunpack.c.h.b16 %v216
        %v309 = vunpack.c.l.b16 %v217
        %v310 = vunpack.c.h.b16 %v217
        %v311 = vunpack.c.l.b16 %v218
        %v312 = vunpack.c.h.b16 %v218
        %v313 = vunpack.c.l.b16 %v219
        %v314 = vunpack.c.h.b16 %v219
        %v315 = vunpack.c.l.b16 %v220
        %v316 = vunpack.c.h.b16 %v220
        %v317 = vunpack.c.l.b16 %v221
        %v318 = vunpack.c.h.b16 %v221
        %v319 = vunpack.c.l.b16 %v222
        %v320 = vunpack.c.h.b16 %v222
        %v321 = vunpack.c.l.b16 %v223
        %v322 = vunpack.c.h.b16 %v223
        %v323 = vunpack.c.l.b16 %v224
        %v324 = vunpack.c.h.b16 %v224
        %v325 = vunpack.c.l.b16 %v225
        %v326 = vunpack.c.h.b16 %v225
        %v327 = vunpack.c.l.b16 %v226
        %v328 = vunpack.c.h.b16 %v226
        %v329 = vunpack.c.l.b16 %v227
        %v330 = vunpack.c.h.b16 %v227
        %v331 = vunpack.c.l.b16 %v228
        %v332 = vunpack.c.h.b16 %v228
        %v333 = vunpack.c.l.b16 %v229
        %v334 = vunpack.c.h.b16 %v229
        %v335 = vunpack.c.l.b16 %v230
        %v336 = vunpack.c.h.b16 %v230
        %v337 = vunpack.c.l.b16 %v231
        %v338 = vunpack.c.h.b16 %v231
        %v339 = vpack.c.b16 %v299, %v297
        %v340 = vpack.c.b16 %v300, %v298
        %v341 = vpack.c.b16 %v303, %v301
        %v342 = vpack.c.b16 %v304, %v302
        %v343 = vpack.c.b16 %v307, %v305
        %v344 = vpack.c.b16 %v308, %v306
        %v345 = vpack.c.b16 %v311, %v309
        %v346 = vpack.c.b16 %v312, %v310
        %v347 = vpack.c.b16 %v315, %v313
        %v348 = vpack.c.b16 %v316, %v314
        %v349 = vpack.c.b16 %v319, %v317
        %v350 = vpack.c.b16 %v320, %v318
        %v351 = vpack.c.b16 %v323, %v321
        %v352 = vpack.c.b16 %v324, %v322
        %v353 = vpack.c.b16 %v327, %v325
        %v354 = vpack.c.b16 %v328, %v326
        %v355 = vpack.c.b16 %v331, %v329
        %v356 = vpack.c.b16 %v332, %v330
        %v357 = vpack.c.b16 %v335, %v333
        %v358 = vpack.c.b16 %v336, %v334
        %v359 = vpack.c.b16 %v337, %v337
        %v360 = vpack.c.b16 %v338, %v338
        %vm381 = vcmask 285696
        %v383 = vsel %vm381, %v265, 0
        %v386 = vsel %vm381, %v267, 0
        %v389 = vsel %vm381, %v269, 0
        %v392 = vsel %vm381, %v271, 0
        %vm394 = vcmask 1040384
        %vm395 = vcmask 1041408
        %v396 = vsel %vm394, 4294967295, 65535
        %v397 = vsel %vm395, %v396, 0
        %v399 = vand.u32 %v359, %v397
        %v402 = vand.u32 %v360, %v397
        %404 = vmatprep.subr.bf16.mxu0 %v354
        %405 = vmatpush1.bf16.msra.mxu0 %v353
        %406 = vmatprep.subr.bf16.mxu0 %v352
        %407 = vmatpush1.bf16.msra.mxu0 %v351
        %408 = vmatprep.subr.bf16.mxu0 %v350
        %409 = vmatpush1.bf16.msra.mxu0 %v349
        %410 = vmatprep.subr.bf16.mxu0 %v348
        %411 = vmatpush1.bf16.msra.mxu0 %v347
        %412 = vmatprep.subr.bf16.mxu0 %v346
        %413 = vmatpush1.bf16.msra.mxu0 %v345
        %414 = vmatprep.subr.bf16.mxu0 %v344
        %415 = vmatpush1.bf16.msra.mxu0 %v343
        %416 = vmatprep.subr.bf16.mxu0 %v342
        %417 = vmatpush1.bf16.msra.mxu0 %v341
        %418 = vmatprep.subr.bf16.mxu0 %v340
        %419 = vmatpush1.bf16.msra.mxu0 %v339
        %420 = vmatprep.subr.bf16.mxu0 0
        %421 = vmatpush2.bf16.msra.mxu0 0
        %422 = vmatprep.subr.bf16.mxu0 0
        %423 = vmatpush2.bf16.msra.mxu0 0
        %424 = vmatprep.subr.bf16.mxu0 0
        %425 = vmatpush2.bf16.msra.mxu0 0
        %426 = vmatprep.subr.bf16.mxu0 0
        %427 = vmatpush2.bf16.msra.mxu0 0
        %428 = vmatprep.subr.bf16.mxu0 0
        %429 = vmatpush2.bf16.msra.mxu0 0
        %430 = vmatprep.subr.bf16.mxu0 %v402
        %431 = vmatpush2.bf16.msra.mxu0 %v399
        %432 = vmatprep.subr.bf16.mxu0 %v358
        %433 = vmatpush2.bf16.msra.mxu0 %v357
        %434 = vmatprep.subr.bf16.mxu0 %v356
        %435 = vmatpush2.bf16.msra.mxu0 %v355
        %436 = vmatprep.mubr.bf16.mxu0 %v383
        %437 = vmatmul.mubr.bf16.gmra.mxu0 %v264
        %v438 = vpop.f32.mrf.mxu0
        %v439 = vadd.f32 0.0, %v438
        %v440 = vpop.f32.mrf.mxu0
        %v441 = vadd.f32 0.0, %v440
        %v442 = vpop.f32.mrf.mxu0
        %v443 = vadd.f32 0.0, %v442
        %v444 = vpop.f32.mrf.mxu0
        %v445 = vadd.f32 0.0, %v444
        %446 = vmatprep.mubr.bf16.mxu0 %v386
        %447 = vmatmul.mubr.bf16.gmra.mxu0 %v266
        %v448 = vpop.f32.mrf.mxu0
        %v449 = vadd.f32 0.0, %v448
        %v450 = vpop.f32.mrf.mxu0
        %v451 = vadd.f32 0.0, %v450
        %v452 = vpop.f32.mrf.mxu0
        %v453 = vadd.f32 0.0, %v452
        %v454 = vpop.f32.mrf.mxu0
        %v455 = vadd.f32 0.0, %v454
        %456 = vmatprep.mubr.bf16.mxu0 %v389
        %457 = vmatmul.mubr.bf16.gmra.mxu0 %v268
        %v458 = vpop.f32.mrf.mxu0
        %v459 = vadd.f32 0.0, %v458
        %v460 = vpop.f32.mrf.mxu0
        %v461 = vadd.f32 0.0, %v460
        %v462 = vpop.f32.mrf.mxu0
        %v463 = vadd.f32 0.0, %v462
        %v464 = vpop.f32.mrf.mxu0
        %v465 = vadd.f32 0.0, %v464
        %466 = vmatprep.mubr.bf16.mxu0 %v392
        %467 = vmatmul.mubr.bf16.gmra.mxu0 %v270
        %v468 = vpop.f32.mrf.mxu0
        %v469 = vadd.f32 0.0, %v468
        %v470 = vpop.f32.mrf.mxu0
        %v471 = vadd.f32 0.0, %v470
        %v472 = vpop.f32.mrf.mxu0
        %v473 = vadd.f32 0.0, %v472
        %v474 = vpop.f32.mrf.mxu0
        %v475 = vadd.f32 0.0, %v474
        %476 = vdwg.mxu0
        %v477 = vmax.f32 %v439, 0.0
        %v478 = vmax.f32 %v441, 0.0
        %v479 = vmax.f32 %v443, 0.0
        %v480 = vmax.f32 %v445, 0.0
        %v481 = vmax.f32 %v449, 0.0
        %v482 = vmax.f32 %v451, 0.0
        %v483 = vmax.f32 %v453, 0.0
        %v484 = vmax.f32 %v455, 0.0
        %v485 = vmax.f32 %v459, 0.0
        %v486 = vmax.f32 %v461, 0.0
        %v487 = vmax.f32 %v463, 0.0
        %v488 = vmax.f32 %v465, 0.0
        %v489 = vmax.f32 %v469, 0.0
        %v490 = vmax.f32 %v471, 0.0
        %v491 = vmax.f32 %v473, 0.0
        %v492 = vmax.f32 %v475, 0.0
        %v493 = vld [vmem:[%s2] sm:$0xf]
        %v494 = vld [vmem:[%s2 + $0x4] sm:$0xf]
        %v495 = vpack.c.bf16 %v479, %v477
        %v496 = vpack.c.bf16 %v480, %v478
        %v497 = vpack.c.bf16 %v483, %v481
        %v498 = vpack.c.bf16 %v484, %v482
        %v499 = vpack.c.bf16 %v487, %v485
        %v500 = vpack.c.bf16 %v488, %v486
        %v501 = vpack.c.bf16 %v491, %v489
        %v502 = vpack.c.bf16 %v492, %v490
        %v505 = vunpack.c.l.b16 %v493
        %v506 = vunpack.c.l.b16 %v494
        %v507 = vpack.c.b16 %v506, %v505
        %vm508 = vcmask 523264
        %v510 = vsel %vm508, %v507, 0
        %512 = vmatprep.subr.bf16.mxu0 0
        %513 = vmatpush1.bf16.msra.mxu0 0
        %514 = vmatprep.subr.bf16.mxu0 0
        %515 = vmatpush1.bf16.msra.mxu0 0
        %516 = vmatprep.subr.bf16.mxu0 0
        %517 = vmatpush1.bf16.msra.mxu0 0
        %518 = vmatprep.subr.bf16.mxu0 0
        %519 = vmatpush1.bf16.msra.mxu0 0
        %520 = vmatprep.subr.bf16.mxu0 %v502
        %521 = vmatpush1.bf16.msra.mxu0 %v501
        %522 = vmatprep.subr.bf16.mxu0 %v500
        %523 = vmatpush1.bf16.msra.mxu0 %v499
        %524 = vmatprep.subr.bf16.mxu0 %v498
        %525 = vmatpush1.bf16.msra.mxu0 %v497
        %526 = vmatprep.subr.bf16.mxu0 %v496
        %527 = vmatpush1.bf16.msra.mxu0 %v495
        %528 = vmatprep.subr.bf16.mxu0 0
        %529 = vmatpush2.bf16.msra.mxu0 0
        %530 = vmatprep.subr.bf16.mxu0 0
        %531 = vmatpush2.bf16.msra.mxu0 0
        %532 = vmatprep.subr.bf16.mxu0 0
        %533 = vmatpush2.bf16.msra.mxu0 0
        %534 = vmatprep.subr.bf16.mxu0 0
        %535 = vmatpush2.bf16.msra.mxu0 0
        %536 = vmatprep.subr.bf16.mxu0 0
        %537 = vmatpush2.bf16.msra.mxu0 0
        %538 = vmatprep.subr.bf16.mxu0 0
        %539 = vmatpush2.bf16.msra.mxu0 0
        %540 = vmatprep.subr.bf16.mxu0 0
        %541 = vmatpush2.bf16.msra.mxu0 0
        %542 = vmatprep.subr.bf16.mxu0 0
        %543 = vmatpush2.bf16.msra.mxu0 0
        %544 = vmatprep.mubr.bf16.mxu0 0
        %545 = vmatmul.mubr.bf16.gmra.mxu0 %v510
        %v546 = vpop.f32.mrf.mxu0
        %v547 = vadd.f32 0.0, %v546
        %v548 = vpop.f32.mrf.mxu0
        %v549 = vadd.f32 0.0, %v548
        %v550 = vpop.f32.mrf.mxu0
        %v551 = vadd.f32 0.0, %v550
        %v552 = vpop.f32.mrf.mxu0
        %v553 = vadd.f32 0.0, %v552
        %554 = vdwg.mxu0
        %v555 = vmin.f32 %v547, %v549
        %v556 = vmin.f32 %v551, %v553
        %v557 = vmin.f32 %v555, %v556
        %558 = vmin.xlane.f32.xlu0 %v557
        %v559 = vpop.xlane.xlu0 %558
        %v560 = vrot.slane %v559, 4
        %v561 = vmin.f32 %v559, %v560
        %v562 = vrot.slane %v561, 2
        %v563 = vmin.f32 %v561, %v562
        %v564 = vrot.slane %v563, 1
        %v565 = vmin.f32 %v563, %v564
        %s566 = vtos %v565
        %v567 = vmax.f32 %v547, %v549
        %v568 = vmax.f32 %v551, %v553
        %v569 = vmax.f32 %v567, %v568
        %570 = vmax.xlane.f32.xlu0 %v569
        %v571 = vpop.xlane.xlu0 %570
        %v572 = vrot.slane %v571, 4
        %v573 = vmax.f32 %v571, %v572
        %v574 = vrot.slane %v573, 2
        %v575 = vmax.f32 %v573, %v574
        %v576 = vrot.slane %v575, 1
        %v577 = vmax.f32 %v575, %v576
        %s578 = vtos %v577
        %v579 = vstv %s566
        %v580 = vsub.f32 %v547, %v579
        %v581 = vsub.f32 %v549, %v579
        %v582 = vsub.f32 %v551, %v579
        %v583 = vsub.f32 %v553, %v579
        %s584 = ssub.f32 %s578, %s566
        %s585 = sadd.f32 %s584, 1e-08
        %v586 = vstv %s585
        %v587 = vrcp.pop %v586
        %s588 = vtos %v587
        %v589 = vstv %s588
        %v590 = vmul.f32 %v580, %v589
        %v591 = vmul.f32 %v581, %v589
        %v592 = vmul.f32 %v582, %v589
        %v593 = vmul.f32 %v583, %v589
        %s594 = sld [smem:[#allocation2 + $0xc]]
        %v595 = vstv %s594
        %v596 = vadd.f32 %v595, 0.0
        %s597 = sld [smem:[#allocation2]]
        %v598 = vstv %s597
        %v599 = vmul.f32 %v590, %v598
        %v600 = vmul.f32 %v591, %v598
        %v601 = vmul.f32 %v592, %v598
        %v602 = vmul.f32 %v593, %v598
        %s603 = sld [smem:[#allocation2 + $0x4]]
        %v604 = vstv %s603
        %v605 = vadd.f32 %v599, %v604
        %v606 = vadd.f32 %v600, %v604
        %v607 = vadd.f32 %v601, %v604
        %v608 = vadd.f32 %v602, %v604
        %v609 = vmax.f32 %v605, 0.0
        %v610 = vmax.f32 %v606, 0.0
        %v611 = vmax.f32 %v607, 0.0
        %v612 = vmax.f32 %v608, 0.0
        %s613 = sld [smem:[#allocation2 + $0x8]]
        %v614 = vstv %s613
        %v615 = vmul.f32 %v609, %v614
        %v616 = vmul.f32 %v610, %v614
        %v617 = vmul.f32 %v611, %v614
        %v618 = vmul.f32 %v612, %v614
        %v619 = vadd.f32 %v596, %v615
        %v620 = vadd.f32 %v596, %v616
        %v621 = vadd.f32 %v596, %v617
        %v622 = vadd.f32 %v596, %v618
        %s623 = sld [smem:[#allocation2 + $0x1]]
        %v624 = vstv %s623
        %v625 = vmul.f32 %v590, %v624
        %v626 = vmul.f32 %v591, %v624
        %v627 = vmul.f32 %v592, %v624
        %v628 = vmul.f32 %v593, %v624
        %s629 = sld [smem:[#allocation2 + $0x5]]
        %v630 = vstv %s629
        %v631 = vadd.f32 %v625, %v630
        %v632 = vadd.f32 %v626, %v630
        %v633 = vadd.f32 %v627, %v630
        %v634 = vadd.f32 %v628, %v630
        %v635 = vmax.f32 %v631, 0.0
        %v636 = vmax.f32 %v632, 0.0
        %v637 = vmax.f32 %v633, 0.0
        %v638 = vmax.f32 %v634, 0.0
        %s639 = sld [smem:[#allocation2 + $0x9]]
        %v640 = vstv %s639
        %v641 = vmul.f32 %v635, %v640
        %v642 = vmul.f32 %v636, %v640
        %v643 = vmul.f32 %v637, %v640
        %v644 = vmul.f32 %v638, %v640
        %v645 = vadd.f32 %v619, %v641
        %v646 = vadd.f32 %v620, %v642
        %v647 = vadd.f32 %v621, %v643
        %v648 = vadd.f32 %v622, %v644
        %s649 = sld [smem:[#allocation2 + $0x2]]
        %v650 = vstv %s649
        %v651 = vmul.f32 %v590, %v650
        %v652 = vmul.f32 %v591, %v650
        %v653 = vmul.f32 %v592, %v650
        %v654 = vmul.f32 %v593, %v650
        %s655 = sld [smem:[#allocation2 + $0x6]]
        %v656 = vstv %s655
        %v657 = vadd.f32 %v651, %v656
        %v658 = vadd.f32 %v652, %v656
        %v659 = vadd.f32 %v653, %v656
        %v660 = vadd.f32 %v654, %v656
        %v661 = vmax.f32 %v657, 0.0
        %v662 = vmax.f32 %v658, 0.0
        %v663 = vmax.f32 %v659, 0.0
        %v664 = vmax.f32 %v660, 0.0
        %s665 = sld [smem:[#allocation2 + $0xa]]
        %v666 = vstv %s665
        %v667 = vmul.f32 %v661, %v666
        %v668 = vmul.f32 %v662, %v666
        %v669 = vmul.f32 %v663, %v666
        %v670 = vmul.f32 %v664, %v666
        %v671 = vadd.f32 %v645, %v667
        %v672 = vadd.f32 %v646, %v668
        %v673 = vadd.f32 %v647, %v669
        %v674 = vadd.f32 %v648, %v670
        %s675 = sld [smem:[#allocation2 + $0x3]]
        %v676 = vstv %s675
        %v677 = vmul.f32 %v590, %v676
        %v678 = vmul.f32 %v591, %v676
        %v679 = vmul.f32 %v592, %v676
        %v680 = vmul.f32 %v593, %v676
        %s681 = sld [smem:[#allocation2 + $0x7]]
        %v682 = vstv %s681
        %v683 = vadd.f32 %v677, %v682
        %v684 = vadd.f32 %v678, %v682
        %v685 = vadd.f32 %v679, %v682
        %v686 = vadd.f32 %v680, %v682
        %v687 = vmax.f32 %v683, 0.0
        %v688 = vmax.f32 %v684, 0.0
        %v689 = vmax.f32 %v685, 0.0
        %v690 = vmax.f32 %v686, 0.0
        %s691 = sld [smem:[#allocation2 + $0xb]]
        %v692 = vstv %s691
        %v693 = vmul.f32 %v687, %v692
        %v694 = vmul.f32 %v688, %v692
        %v695 = vmul.f32 %v689, %v692
        %v696 = vmul.f32 %v690, %v692
        %v697 = vadd.f32 %v671, %v693
        %v698 = vadd.f32 %v672, %v694
        %v699 = vadd.f32 %v673, %v695
        %v700 = vadd.f32 %v674, %v696
        %v701 = vadd.f32 %v590, %v697
        %v702 = vadd.f32 %v591, %v698
        %v703 = vadd.f32 %v592, %v699
        %v704 = vadd.f32 %v593, %v700
        %v705 = vlaneseq
        %v706 = vand.u32 %v705, 127
        %v707 = vadd.s32 %v706, 128
        %v708 = vcvt.s32.f32 %v706
        %v709 = vcvt.s32.f32 %v707
        %v710 = vmul.f32 %v708, 0.0625
        %v711 = vmul.f32 %v709, 0.0625
        %v712 = vfloor.f32 %v710
        %v713 = vfloor.f32 %v711
        %v714 = vmul.f32 %v712, 16.0
        %v715 = vmul.f32 %v713, 16.0
        %v716 = vsub.f32 %v708, %v714
        %v717 = vsub.f32 %v709, %v715
        %v718 = vlaneseq
        %v719 = vshrl.u32 %v718, 7
        %v720 = vadd.s32 %v719, 8
        %v721 = vcvt.s32.f32 %v719
        %v722 = vcvt.s32.f32 %v720
        %s723 = sld [smem:[#allocation2 + $0xd]]
        %v724 = vstv %s723
        %v725 = vmul.f32 %v701, %v724
        %v726 = vmul.f32 %v702, %v724
        %v727 = vmul.f32 %v703, %v724
        %v728 = vmul.f32 %v704, %v724
        %s729 = sld [smem:[#allocation2 + $0x11]]
        %v730 = vstv %s729
        %v731 = vadd.f32 %v725, %v730
        %v732 = vadd.f32 %v726, %v730
        %v733 = vadd.f32 %v727, %v730
        %v734 = vadd.f32 %v728, %v730
        %v735 = vmax.f32 %v731, %v732
        %v736 = vmax.f32 %v733, %v734
        %v737 = vmax.f32 %v735, %v736
        %738 = vmax.xlane.f32.xlu0 %v737
        %v739 = vpop.xlane.xlu0 %738
        %v740 = vrot.slane %v739, 4
        %v741 = vmax.f32 %v739, %v740
        %v742 = vrot.slane %v741, 2
        %v743 = vmax.f32 %v741, %v742
        %v744 = vrot.slane %v743, 1
        %v745 = vmax.f32 %v743, %v744
        %s746 = vtos %v745
        %v747 = vstv %s746
        %v748 = vsub.f32 %v731, %v747
        %v749 = vsub.f32 %v732, %v747
        %v750 = vsub.f32 %v733, %v747
        %v751 = vsub.f32 %v734, %v747
        %v752 = vmul.f32 %v748, 1.442695
        %v753 = vpow.pop %v752
        %v754 = vmul.f32 %v749, 1.442695
        %v755 = vpow.pop %v754
        %v756 = vmul.f32 %v750, 1.442695
        %v757 = vpow.pop %v756
        %v758 = vmul.f32 %v751, 1.442695
        %v759 = vpow.pop %v758
        %v760 = vadd.f32 %v753, %v755
        %v761 = vadd.f32 %v760, %v757
        %v762 = vadd.f32 %v761, %v759
        %763 = vadd.xlane.f32.xlu0 %v762
        %v764 = vpop.xlane.xlu0 %763
        %v765 = vrot.slane %v764, 4
        %v766 = vadd.f32 %v764, %v765
        %v767 = vrot.slane %v766, 2
        %v768 = vadd.f32 %v766, %v767
        %v769 = vrot.slane %v768, 1
        %v770 = vadd.f32 %v768, %v769
        %s771 = vtos %v770
        %v772 = vstv %s771
        %v773 = vrcp.pop %v772
        %s774 = vtos %v773
        %v775 = vmul.f32 %v753, %v716
        %v776 = vmul.f32 %v755, %v717
        %v777 = vmul.f32 %v757, %v716
        %v778 = vmul.f32 %v759, %v717
        %v779 = vadd.f32 %v775, %v776
        %v780 = vadd.f32 %v779, %v777
        %v781 = vadd.f32 %v780, %v778
        %782 = vadd.xlane.f32.xlu0 %v781
        %v783 = vpop.xlane.xlu0 %782
        %v784 = vrot.slane %v783, 4
        %v785 = vadd.f32 %v783, %v784
        %v786 = vrot.slane %v785, 2
        %v787 = vadd.f32 %v785, %v786
        %v788 = vrot.slane %v787, 1
        %v789 = vadd.f32 %v787, %v788
        %s790 = vtos %v789
        %s791 = smul.f32 %s790, %s774
        %v792 = vmul.f32 %v753, %v712
        %v793 = vmul.f32 %v755, %v713
        %v794 = vmul.f32 %v757, %v712
        %v795 = vmul.f32 %v759, %v713
        %v796 = vadd.f32 %v792, %v793
        %v797 = vadd.f32 %v796, %v794
        %v798 = vadd.f32 %v797, %v795
        %799 = vadd.xlane.f32.xlu0 %v798
        %v800 = vpop.xlane.xlu0 %799
        %v801 = vrot.slane %v800, 4
        %v802 = vadd.f32 %v800, %v801
        %v803 = vrot.slane %v802, 2
        %v804 = vadd.f32 %v802, %v803
        %v805 = vrot.slane %v804, 1
        %v806 = vadd.f32 %v804, %v805
        %s807 = vtos %v806
        %s808 = smul.f32 %s807, %s774
        %v809 = vmul.f32 %v753, %v721
        %v810 = vmul.f32 %v755, %v721
        %v811 = vmul.f32 %v757, %v722
        %v812 = vmul.f32 %v759, %v722
        %v813 = vadd.f32 %v809, %v810
        %v814 = vadd.f32 %v813, %v811
        %v815 = vadd.f32 %v814, %v812
        %816 = vadd.xlane.f32.xlu0 %v815
        %v817 = vpop.xlane.xlu0 %816
        %v818 = vrot.slane %v817, 4
        %v819 = vadd.f32 %v817, %v818
        %v820 = vrot.slane %v819, 2
        %v821 = vadd.f32 %v819, %v820
        %v822 = vrot.slane %v821, 1
        %v823 = vadd.f32 %v821, %v822
        %s824 = vtos %v823
        %s825 = smul.f32 %s824, %s774
        %vm826 = vcmp.eq.s32.totalorder %v719, 0
        %vm827 = vcmp.eq.s32.totalorder %v706, 0
        %vm828 = vmand %vm826, %vm827
        %v829 = vstv %s791
        %v830 = vsel %vm828, %v829, 0.0
        %vm831 = vcmp.eq.s32.totalorder %v706, 1
        %vm832 = vmand %vm826, %vm831
        %v833 = vstv %s808
        %v834 = vsel %vm832, %v833, %v830
        %vm835 = vcmp.eq.s32.totalorder %v706, 2
        %vm836 = vmand %vm826, %vm835
        %v837 = vstv %s825
        %v838 = vsel %vm836, %v837, %v834
        %s839 = sld [smem:[#allocation2 + $0xe]]
        %v840 = vstv %s839
        %v841 = vmul.f32 %v701, %v840
        %v842 = vmul.f32 %v702, %v840
        %v843 = vmul.f32 %v703, %v840
        %v844 = vmul.f32 %v704, %v840
        %s845 = sld [smem:[#allocation2 + $0x12]]
        %v846 = vstv %s845
        %v847 = vadd.f32 %v841, %v846
        %v848 = vadd.f32 %v842, %v846
        %v849 = vadd.f32 %v843, %v846
        %v850 = vadd.f32 %v844, %v846
        %v851 = vmax.f32 %v847, %v848
        %v852 = vmax.f32 %v849, %v850
        %v853 = vmax.f32 %v851, %v852
        %854 = vmax.xlane.f32.xlu0 %v853
        %v855 = vpop.xlane.xlu0 %854
        %v856 = vrot.slane %v855, 4
        %v857 = vmax.f32 %v855, %v856
        %v858 = vrot.slane %v857, 2
        %v859 = vmax.f32 %v857, %v858
        %v860 = vrot.slane %v859, 1
        %v861 = vmax.f32 %v859, %v860
        %s862 = vtos %v861
        %v863 = vstv %s862
        %v864 = vsub.f32 %v847, %v863
        %v865 = vsub.f32 %v848, %v863
        %v866 = vsub.f32 %v849, %v863
        %v867 = vsub.f32 %v850, %v863
        %v868 = vmul.f32 %v864, 1.442695
        %v869 = vpow.pop %v868
        %v870 = vmul.f32 %v865, 1.442695
        %v871 = vpow.pop %v870
        %v872 = vmul.f32 %v866, 1.442695
        %v873 = vpow.pop %v872
        %v874 = vmul.f32 %v867, 1.442695
        %v875 = vpow.pop %v874
        %v876 = vadd.f32 %v869, %v871
        %v877 = vadd.f32 %v876, %v873
        %v878 = vadd.f32 %v877, %v875
        %879 = vadd.xlane.f32.xlu0 %v878
        %v880 = vpop.xlane.xlu0 %879
        %v881 = vrot.slane %v880, 4
        %v882 = vadd.f32 %v880, %v881
        %v883 = vrot.slane %v882, 2
        %v884 = vadd.f32 %v882, %v883
        %v885 = vrot.slane %v884, 1
        %v886 = vadd.f32 %v884, %v885
        %s887 = vtos %v886
        %v888 = vstv %s887
        %v889 = vrcp.pop %v888
        %s890 = vtos %v889
        %v891 = vmul.f32 %v869, %v716
        %v892 = vmul.f32 %v871, %v717
        %v893 = vmul.f32 %v873, %v716
        %v894 = vmul.f32 %v875, %v717
        %v895 = vadd.f32 %v891, %v892
        %v896 = vadd.f32 %v895, %v893
        %v897 = vadd.f32 %v896, %v894
        %898 = vadd.xlane.f32.xlu0 %v897
        %v899 = vpop.xlane.xlu0 %898
        %v900 = vrot.slane %v899, 4
        %v901 = vadd.f32 %v899, %v900
        %v902 = vrot.slane %v901, 2
        %v903 = vadd.f32 %v901, %v902
        %v904 = vrot.slane %v903, 1
        %v905 = vadd.f32 %v903, %v904
        %s906 = vtos %v905
        %s907 = smul.f32 %s906, %s890
        %v908 = vmul.f32 %v869, %v712
        %v909 = vmul.f32 %v871, %v713
        %v910 = vmul.f32 %v873, %v712
        %v911 = vmul.f32 %v875, %v713
        %v912 = vadd.f32 %v908, %v909
        %v913 = vadd.f32 %v912, %v910
        %v914 = vadd.f32 %v913, %v911
        %915 = vadd.xlane.f32.xlu0 %v914
        %v916 = vpop.xlane.xlu0 %915
        %v917 = vrot.slane %v916, 4
        %v918 = vadd.f32 %v916, %v917
        %v919 = vrot.slane %v918, 2
        %v920 = vadd.f32 %v918, %v919
        %v921 = vrot.slane %v920, 1
        %v922 = vadd.f32 %v920, %v921
        %s923 = vtos %v922
        %s924 = smul.f32 %s923, %s890
        %v925 = vmul.f32 %v869, %v721
        %v926 = vmul.f32 %v871, %v721
        %v927 = vmul.f32 %v873, %v722
        %v928 = vmul.f32 %v875, %v722
        %v929 = vadd.f32 %v925, %v926
        %v930 = vadd.f32 %v929, %v927
        %v931 = vadd.f32 %v930, %v928
        %932 = vadd.xlane.f32.xlu0 %v931
        %v933 = vpop.xlane.xlu0 %932
        %v934 = vrot.slane %v933, 4
        %v935 = vadd.f32 %v933, %v934
        %v936 = vrot.slane %v935, 2
        %v937 = vadd.f32 %v935, %v936
        %v938 = vrot.slane %v937, 1
        %v939 = vadd.f32 %v937, %v938
        %s940 = vtos %v939
        %s941 = smul.f32 %s940, %s890
        %vm942 = vcmp.eq.s32.totalorder %v719, 1
        %vm943 = vmand %vm942, %vm827
        %v944 = vstv %s907
        %v945 = vsel %vm943, %v944, %v838
        %vm946 = vmand %vm942, %vm831
        %v947 = vstv %s924
        %v948 = vsel %vm946, %v947, %v945
        %vm949 = vmand %vm942, %vm835
        %v950 = vstv %s941
        %v951 = vsel %vm949, %v950, %v948
        %s952 = sld [smem:[#allocation2 + $0xf]]
        %v953 = vstv %s952
        %v954 = vmul.f32 %v701, %v953
        %v955 = vmul.f32 %v702, %v953
        %v956 = vmul.f32 %v703, %v953
        %v957 = vmul.f32 %v704, %v953
        %s958 = sld [smem:[#allocation2 + $0x13]]
        %v959 = vstv %s958
        %v960 = vadd.f32 %v954, %v959
        %v961 = vadd.f32 %v955, %v959
        %v962 = vadd.f32 %v956, %v959
        %v963 = vadd.f32 %v957, %v959
        %v964 = vmax.f32 %v960, %v961
        %v965 = vmax.f32 %v962, %v963
        %v966 = vmax.f32 %v964, %v965
        %967 = vmax.xlane.f32.xlu0 %v966
        %v968 = vpop.xlane.xlu0 %967
        %v969 = vrot.slane %v968, 4
        %v970 = vmax.f32 %v968, %v969
        %v971 = vrot.slane %v970, 2
        %v972 = vmax.f32 %v970, %v971
        %v973 = vrot.slane %v972, 1
        %v974 = vmax.f32 %v972, %v973
        %s975 = vtos %v974
        %v976 = vstv %s975
        %v977 = vsub.f32 %v960, %v976
        %v978 = vsub.f32 %v961, %v976
        %v979 = vsub.f32 %v962, %v976
        %v980 = vsub.f32 %v963, %v976
        %v981 = vmul.f32 %v977, 1.442695
        %v982 = vpow.pop %v981
        %v983 = vmul.f32 %v978, 1.442695
        %v984 = vpow.pop %v983
        %v985 = vmul.f32 %v979, 1.442695
        %v986 = vpow.pop %v985
        %v987 = vmul.f32 %v980, 1.442695
        %v988 = vpow.pop %v987
        %v989 = vadd.f32 %v982, %v984
        %v990 = vadd.f32 %v989, %v986
        %v991 = vadd.f32 %v990, %v988
        %992 = vadd.xlane.f32.xlu0 %v991
        %v993 = vpop.xlane.xlu0 %992
        %v994 = vrot.slane %v993, 4
        %v995 = vadd.f32 %v993, %v994
        %v996 = vrot.slane %v995, 2
        %v997 = vadd.f32 %v995, %v996
        %v998 = vrot.slane %v997, 1
        %v999 = vadd.f32 %v997, %v998
        %s1000 = vtos %v999
        %v1001 = vstv %s1000
        %v1002 = vrcp.pop %v1001
        %s1003 = vtos %v1002
        %v1004 = vmul.f32 %v982, %v716
        %v1005 = vmul.f32 %v984, %v717
        %v1006 = vmul.f32 %v986, %v716
        %v1007 = vmul.f32 %v988, %v717
        %v1008 = vadd.f32 %v1004, %v1005
        %v1009 = vadd.f32 %v1008, %v1006
        %v1010 = vadd.f32 %v1009, %v1007
        %1011 = vadd.xlane.f32.xlu0 %v1010
        %v1012 = vpop.xlane.xlu0 %1011
        %v1013 = vrot.slane %v1012, 4
        %v1014 = vadd.f32 %v1012, %v1013
        %v1015 = vrot.slane %v1014, 2
        %v1016 = vadd.f32 %v1014, %v1015
        %v1017 = vrot.slane %v1016, 1
        %v1018 = vadd.f32 %v1016, %v1017
        %s1019 = vtos %v1018
        %s1020 = smul.f32 %s1019, %s1003
        %v1021 = vmul.f32 %v982, %v712
        %v1022 = vmul.f32 %v984, %v713
        %v1023 = vmul.f32 %v986, %v712
        %v1024 = vmul.f32 %v988, %v713
        %v1025 = vadd.f32 %v1021, %v1022
        %v1026 = vadd.f32 %v1025, %v1023
        %v1027 = vadd.f32 %v1026, %v1024
        %1028 = vadd.xlane.f32.xlu0 %v1027
        %v1029 = vpop.xlane.xlu0 %1028
        %v1030 = vrot.slane %v1029, 4
        %v1031 = vadd.f32 %v1029, %v1030
        %v1032 = vrot.slane %v1031, 2
        %v1033 = vadd.f32 %v1031, %v1032
        %v1034 = vrot.slane %v1033, 1
        %v1035 = vadd.f32 %v1033, %v1034
        %s1036 = vtos %v1035
        %s1037 = smul.f32 %s1036, %s1003
        %v1038 = vmul.f32 %v982, %v721
        %v1039 = vmul.f32 %v984, %v721
        %v1040 = vmul.f32 %v986, %v722
        %v1041 = vmul.f32 %v988, %v722
        %v1042 = vadd.f32 %v1038, %v1039
        %v1043 = vadd.f32 %v1042, %v1040
        %v1044 = vadd.f32 %v1043, %v1041
        %1045 = vadd.xlane.f32.xlu0 %v1044
        %v1046 = vpop.xlane.xlu0 %1045
        %v1047 = vrot.slane %v1046, 4
        %v1048 = vadd.f32 %v1046, %v1047
        %v1049 = vrot.slane %v1048, 2
        %v1050 = vadd.f32 %v1048, %v1049
        %v1051 = vrot.slane %v1050, 1
        %v1052 = vadd.f32 %v1050, %v1051
        %s1053 = vtos %v1052
        %s1054 = smul.f32 %s1053, %s1003
        %vm1055 = vcmp.eq.s32.totalorder %v719, 2
        %vm1056 = vmand %vm1055, %vm827
        %v1057 = vstv %s1020
        %v1058 = vsel %vm1056, %v1057, %v951
        %vm1059 = vmand %vm1055, %vm831
        %v1060 = vstv %s1037
        %v1061 = vsel %vm1059, %v1060, %v1058
        %vm1062 = vmand %vm1055, %vm835
        %v1063 = vstv %s1054
        %v1064 = vsel %vm1062, %v1063, %v1061
        %s1065 = sld [smem:[#allocation2 + $0x10]]
        %v1066 = vstv %s1065
        %v1067 = vmul.f32 %v701, %v1066
        %v1068 = vmul.f32 %v702, %v1066
        %v1069 = vmul.f32 %v703, %v1066
        %v1070 = vmul.f32 %v704, %v1066
        %s1071 = sld [smem:[#allocation2 + $0x14]]
        %v1072 = vstv %s1071
        %v1073 = vadd.f32 %v1067, %v1072
        %v1074 = vadd.f32 %v1068, %v1072
        %v1075 = vadd.f32 %v1069, %v1072
        %v1076 = vadd.f32 %v1070, %v1072
        %v1077 = vmax.f32 %v1073, %v1074
        %v1078 = vmax.f32 %v1075, %v1076
        %v1079 = vmax.f32 %v1077, %v1078
        %1080 = vmax.xlane.f32.xlu0 %v1079
        %v1081 = vpop.xlane.xlu0 %1080
        %v1082 = vrot.slane %v1081, 4
        %v1083 = vmax.f32 %v1081, %v1082
        %v1084 = vrot.slane %v1083, 2
        %v1085 = vmax.f32 %v1083, %v1084
        %v1086 = vrot.slane %v1085, 1
        %v1087 = vmax.f32 %v1085, %v1086
        %s1088 = vtos %v1087
        %v1089 = vstv %s1088
        %v1090 = vsub.f32 %v1073, %v1089
        %v1091 = vsub.f32 %v1074, %v1089
        %v1092 = vsub.f32 %v1075, %v1089
        %v1093 = vsub.f32 %v1076, %v1089
        %v1094 = vmul.f32 %v1090, 1.442695
        %v1095 = vpow.pop %v1094
        %v1096 = vmul.f32 %v1091, 1.442695
        %v1097 = vpow.pop %v1096
        %v1098 = vmul.f32 %v1092, 1.442695
        %v1099 = vpow.pop %v1098
        %v1100 = vmul.f32 %v1093, 1.442695
        %v1101 = vpow.pop %v1100
        %v1102 = vadd.f32 %v1095, %v1097
        %v1103 = vadd.f32 %v1102, %v1099
        %v1104 = vadd.f32 %v1103, %v1101
        %1105 = vadd.xlane.f32.xlu0 %v1104
        %v1106 = vpop.xlane.xlu0 %1105
        %v1107 = vrot.slane %v1106, 4
        %v1108 = vadd.f32 %v1106, %v1107
        %v1109 = vrot.slane %v1108, 2
        %v1110 = vadd.f32 %v1108, %v1109
        %v1111 = vrot.slane %v1110, 1
        %v1112 = vadd.f32 %v1110, %v1111
        %s1113 = vtos %v1112
        %v1114 = vstv %s1113
        %v1115 = vrcp.pop %v1114
        %s1116 = vtos %v1115
        %v1117 = vmul.f32 %v1095, %v716
        %v1118 = vmul.f32 %v1097, %v717
        %v1119 = vmul.f32 %v1099, %v716
        %v1120 = vmul.f32 %v1101, %v717
        %v1121 = vadd.f32 %v1117, %v1118
        %v1122 = vadd.f32 %v1121, %v1119
        %v1123 = vadd.f32 %v1122, %v1120
        %1124 = vadd.xlane.f32.xlu0 %v1123
        %v1125 = vpop.xlane.xlu0 %1124
        %v1126 = vrot.slane %v1125, 4
        %v1127 = vadd.f32 %v1125, %v1126
        %v1128 = vrot.slane %v1127, 2
        %v1129 = vadd.f32 %v1127, %v1128
        %v1130 = vrot.slane %v1129, 1
        %v1131 = vadd.f32 %v1129, %v1130
        %s1132 = vtos %v1131
        %s1133 = smul.f32 %s1132, %s1116
        %v1134 = vmul.f32 %v1095, %v712
        %v1135 = vmul.f32 %v1097, %v713
        %v1136 = vmul.f32 %v1099, %v712
        %v1137 = vmul.f32 %v1101, %v713
        %v1138 = vadd.f32 %v1134, %v1135
        %v1139 = vadd.f32 %v1138, %v1136
        %v1140 = vadd.f32 %v1139, %v1137
        %1141 = vadd.xlane.f32.xlu0 %v1140
        %v1142 = vpop.xlane.xlu0 %1141
        %v1143 = vrot.slane %v1142, 4
        %v1144 = vadd.f32 %v1142, %v1143
        %v1145 = vrot.slane %v1144, 2
        %v1146 = vadd.f32 %v1144, %v1145
        %v1147 = vrot.slane %v1146, 1
        %v1148 = vadd.f32 %v1146, %v1147
        %s1149 = vtos %v1148
        %s1150 = smul.f32 %s1149, %s1116
        %v1151 = vmul.f32 %v1095, %v721
        %v1152 = vmul.f32 %v1097, %v721
        %v1153 = vmul.f32 %v1099, %v722
        %v1154 = vmul.f32 %v1101, %v722
        %v1155 = vadd.f32 %v1151, %v1152
        %v1156 = vadd.f32 %v1155, %v1153
        %v1157 = vadd.f32 %v1156, %v1154
        %1158 = vadd.xlane.f32.xlu0 %v1157
        %v1159 = vpop.xlane.xlu0 %1158
        %v1160 = vrot.slane %v1159, 4
        %v1161 = vadd.f32 %v1159, %v1160
        %v1162 = vrot.slane %v1161, 2
        %v1163 = vadd.f32 %v1161, %v1162
        %v1164 = vrot.slane %v1163, 1
        %v1165 = vadd.f32 %v1163, %v1164
        %s1166 = vtos %v1165
        %s1167 = smul.f32 %s1166, %s1116
        %vm1168 = vcmp.eq.s32.totalorder %v719, 3
        %vm1169 = vmand %vm1168, %vm827
        %v1170 = vstv %s1133
        %v1171 = vsel %vm1169, %v1170, %v1064
        %vm1172 = vmand %vm1168, %vm831
        %v1173 = vstv %s1150
        %v1174 = vsel %vm1172, %v1173, %v1171
        %vm1175 = vmand %vm1168, %vm835
        %v1176 = vstv %s1167
        %v1177 = vsel %vm1175, %v1176, %v1174
        %1178 = vst [vmem:[%s209] sm:$0xf] %v1177
        %p1179 = scmp.lt.s32.totalorder %s16, 1
        %s1180 = scalar_select %p1179, %s16, 1
        %s1181 = smul.addr %s1180, 4
        %s1182 = scalar_lea.vmem %s4, %s1181
        // Predicated region
        $region41: #{_lambda_.1} parent=35 // pred_check
          %p1183 = pneg %p123
        $region42: #{_lambda_.1} parent=35 // pred_check_branch
          %1185 = sbr.rel (%p1183) target = $region44
        $region43: #{_lambda_.1} parent=35 // pred_region
          _
        $region44: #{_lambda_.1} parent=35 // pred_fallthru
          _
      $region36: #{_lambda_.1} parent=5 // pred_fallthru
        _
      %p1186 = scmp.le.s32.totalorder 2, %s11
      // Predicated region
      $region45: #{_lambda_.1} parent=5 // pred_check
        %p1187 = pneg %p1186
      $region46: #{_lambda_.1} parent=5 // pred_check_branch
        %1189 = sbr.rel (%p1187) target = $region48
      $region47: #{_lambda_.1} parent=5 // pred_region
        %s1190 = ssub.s32 %s11, 2
        // Predicated region
        $region49: #{_lambda_.1} parent=47 // pred_check
          %p1191 = pneg %p129
        $region50: #{_lambda_.1} parent=47 // pred_check_branch
          %1193 = sbr.rel (%p1191) target = $region52
        $region51: #{_lambda_.1} parent=47 // pred_region
          %p1194 = scmp.lt.s32.totalorder %s17, 1
          %s1195 = scalar_select %p1194, %s17, 1
          %s1196 = smul.addr %s1195, 4
          %s1197 = scalar_lea.vmem %s4, %s1196
        $region52: #{_lambda_.1} parent=47 // pred_fallthru
          _
      $region48: #{_lambda_.1} parent=5 // pred_fallthru
        _
    $region6: #{_lambda_.1} parent=1 // loop_footer
      %s15 = sadd.s32 1, %s11
    $region7: #{_lambda_.1} parent=1 // loop_footer_branch
      %10 = sbr.rel target = $region3
    $region8: #{_lambda_.1} parent=1 // loop_exit
      _
    %1198 = vsyncpa [#allocation3], 1
    %s1199 = scalar_lea.sflag [#allocation3], 1
    %1200 = vsyncpa %s1199, 1

</llo_original>
